<compile_context>
chip_gen: v5e
topology: v5e:2x2
jax: 0.10.0
libtpu: 0.0.40
codegen_flags: <defaults>
</compile_context>

<pallas_src>
import math
import jax
import jax.numpy as jnp
from jax.experimental import pallas as pl
from jax.experimental.pallas import tpu as pltpu

# ----------------------------- config (small, consistent with module) --------
VOCAB = 50
SEGMENTS = 2
POSITIONS = 16
HIDDEN = 32
HEADS = 4
HEAD_DIM = HIDDEN // HEADS
FFN = 64
LAYERS = 2
NUM_CLASSES = 2          # stand-in for datasets.multi_domain_num_classes[task]
LN_EPS = 1e-5
BATCH = 2
SEQ = 8
BS = BATCH * SEQ


# ----------------------------- in-kernel helpers -----------------------------
def _layernorm(x, g, b):
    mu = jnp.mean(x, axis=-1, keepdims=True)
    var = jnp.mean((x - mu) ** 2, axis=-1, keepdims=True)
    return (x - mu) * jax.lax.rsqrt(var + LN_EPS) * g + b


def _gelu(x):
    # tanh approximation — matches the reference `gelu` exactly.
    return 0.5 * x * (1.0 + jnp.tanh(math.sqrt(2.0 / math.pi) * (x + 0.044715 * x ** 3)))


# ----------------------------- fused kernel ----------------------------------
def bert_kernel(x_ref, bias_ref, wqkv_ref, wo_ref, w1_ref, w2_ref,
                blin_ref, vech_ref, vecs_ref, headw_ref, o_ref):
    # ---- embeddings LayerNorm (embeddings already summed in wrapper) --------
    vecs = vecs_ref[...]                                  # (4, H): emb_g, emb_b, pool_b, cls_b
    x = _layernorm(x_ref[...], vecs[0:1, :], vecs[1:2, :])
    # TODO(synk): embedding / attention / hidden dropouts are identity in eval mode, omitted.

    # attention bias tiled over heads along the sublane axis, hoisted out of the loop
    bias_all = jnp.tile(bias_ref[...], (HEADS, 1))        # (HEADS*BS, BS)
    inv_sqrt_d = jnp.float32(1.0 / math.sqrt(HEAD_DIM))

    # ---- transformer layers (static unrolled loop, LAYERS=2) ----------------
    for l in range(LAYERS):
        vec = vech_ref[l]                                 # (6, H): bo, ln1_g, ln1_b, b2, ln2_g, ln2_b
        blin = blin_ref[l]                                # (2, 3H)
        b_qkv = blin[0:1, :]                              # (1, 3H)
        b_1 = blin[1:2, 0:FFN]                            # (1, FFN)

        # fused Q|K|V projection: one (BS,H) x (H,3H) matmul
        qkv = jnp.dot(x, wqkv_ref[l], preferred_element_type=jnp.float32) + b_qkv
        q = qkv[:, 0:HIDDEN]
        k = qkv[:, HIDDEN:2 * HIDDEN]
        v = qkv[:, 2 * HIDDEN:3 * HIDDEN]

        # per-head scores, no explicit K transpose (contract last dims on the MXU)
        scores = []
        for h in range(HEADS):
            lo = h * HEAD_DIM
            hi = lo + HEAD_DIM
            scores.append(jax.lax.dot_general(
                q[:, lo:hi], k[:, lo:hi],
                dimension_numbers=(((1,), (1,)), ((), ())),
                preferred_element_type=jnp.float32))      # (BS, BS)
        s_all = jnp.concatenate(scores, axis=0) * inv_sqrt_d + bias_all   # (HEADS*BS, BS)

        # one batched softmax for all heads
        s_all = s_all - jnp.max(s_all, axis=-1, keepdims=True)
        p_all = jnp.exp(s_all)
        p_all = p_all * pl.reciprocal(jnp.sum(p_all, axis=-1, keepdims=True), approx=False)

        # per-head P @ V kept in registers, concatenated along lanes (no scratch)
        ctxs = []
        for h in range(HEADS):
            lo = h * HEAD_DIM
            hi = lo + HEAD_DIM
            ctxs.append(jnp.dot(p_all[h * BS:(h + 1) * BS, :], v[:, lo:hi],
                                preferred_element_type=jnp.float32))
        ctx = jnp.concatenate(ctxs, axis=-1)              # (BS, H)

        # output projection (K=H), residual + LayerNorm
        ctx = jnp.dot(ctx, wo_ref[l], preferred_element_type=jnp.float32) + vec[0:1]
        attn_out = _layernorm(x + ctx, vec[1:2], vec[2:3])

        # feed-forward network + residual + LayerNorm
        h1 = _gelu(jnp.dot(attn_out, w1_ref[l], preferred_element_type=jnp.float32) + b_1)
        ffn = jnp.dot(h1, w2_ref[l], preferred_element_type=jnp.float32) + vec[3:4]
        x = _layernorm(attn_out + ffn, vec[4:5], vec[5:6])

    # ---- CLS pooler + classifier --------------------------------------------
    # CLS-row extraction via a tiny (BATCH, BS) 0/1 selection matmul (MXU idle here).
    col = jax.lax.broadcasted_iota(jnp.int32, (BATCH, BS), 1)
    row = jax.lax.broadcasted_iota(jnp.int32, (BATCH, BS), 0)
    sel = (col == row * SEQ).astype(jnp.float32)          # (B, BS), 1 at each CLS row
    cls = jnp.dot(sel, x, preferred_element_type=jnp.float32)             # (B, H)

    headw = headw_ref[...]                                # (H, H + NC): pool_w | cls_w
    pooled = jnp.tanh(jnp.dot(cls, headw[:, 0:HIDDEN],
                              preferred_element_type=jnp.float32) + vecs[2:3, :])
    o_ref[...] = (jnp.dot(pooled, headw[:, HIDDEN:HIDDEN + NUM_CLASSES],
                          preferred_element_type=jnp.float32)
                  + vecs[3:4, 0:NUM_CLASSES])


# ----------------------------- wrapper ----------------------------------------
@jax.jit
def bert_forward(params, token_ids, segment_ids, position_ids, attn_mask):
    B, S = token_ids.shape
    # Glue: embedding gathers + pre-sum (one input DMA instead of three) and the
    # (BS, BS) additive attention bias (key padding * -10000 within a batch,
    # -1e30 across batches -> exactly 0 probability after softmax).
    x_sum = (jnp.take(params["tok_emb"], token_ids.reshape(-1), axis=0)
             + jnp.take(params["seg_emb"], segment_ids.reshape(-1), axis=0)
             + jnp.take(params["pos_emb"], position_ids.reshape(-1), axis=0))   # (B*S, H)
    key_bias = attn_mask.astype(jnp.float32).reshape(1, B * S) * jnp.float32(-10000.0)
    blk = jnp.arange(B * S, dtype=jnp.int32) // S
    attn_bias = jnp.where(blk[:, None] == blk[None, :], key_bias, jnp.float32(-1e30))

    vmem = pl.BlockSpec(memory_space=pltpu.MemorySpace.VMEM)
    logits = pl.pallas_call(
        bert_kernel,
        out_shape=jax.ShapeDtypeStruct((B, NUM_CLASSES), jnp.float32),
        in_specs=[vmem] * 10,
        out_specs=vmem,
    )(x_sum, attn_bias,
      params["w_qkv"], params["w_o"], params["w_1"], params["w_2"],
      params["b_lin"], params["vec_h"], params["vec_s"], params["head_w"])

    # PyTorch .squeeze(-1): only squeezes when num_classes == 1
    if logits.shape[-1] == 1:
        logits = jnp.squeeze(logits, axis=-1)
    return logits


# ----------------------------- parameter init ---------------------------------
def init_params(key):
    def normal(k, shape):
        return 0.02 * jax.random.normal(k, shape, dtype=jnp.float32)

    keys = iter(jax.random.split(key, 12))
    p = {}
    p["tok_emb"] = normal(next(keys), (VOCAB, HIDDEN))
    p["seg_emb"] = normal(next(keys), (SEGMENTS, HIDDEN))
    p["pos_emb"] = normal(next(keys), (POSITIONS, HIDDEN))

    # Stacked per-layer weights: [LAYERS, ...]
    p["w_qkv"] = normal(next(keys), (LAYERS, HIDDEN, 3 * HIDDEN))   # q|k|v fused
    p["w_o"]   = normal(next(keys), (LAYERS, HIDDEN, HIDDEN))
    p["w_1"]   = normal(next(keys), (LAYERS, HIDDEN, FFN))
    p["w_2"]   = normal(next(keys), (LAYERS, FFN, HIDDEN))
    # b_lin rows: 0 = fused qkv bias (width 3H), 1[:FFN] = ffn dense1 bias
    p["b_lin"] = jnp.zeros((LAYERS, 2, 3 * HIDDEN), jnp.float32)
    # vec_h rows: 0=attn-out bias, 1=ln1_g, 2=ln1_b, 3=ffn-out bias, 4=ln2_g, 5=ln2_b
    p["vec_h"] = (jnp.zeros((LAYERS, 6, HIDDEN), jnp.float32)
                  .at[:, 1, :].set(1.0)
                  .at[:, 4, :].set(1.0))
    # vec_s rows: 0=emb_ln_g, 1=emb_ln_b, 2=pooler bias, 3[:NUM_CLASSES]=classifier bias
    p["vec_s"] = jnp.zeros((4, HIDDEN), jnp.float32).at[0, :].set(1.0)
    # head_w: pooler weight (H,H) | classifier weight (H,NC) packed along lanes
    p["head_w"] = jnp.concatenate(
        [normal(next(keys), (HIDDEN, HIDDEN)),
         normal(next(keys), (HIDDEN, NUM_CLASSES))], axis=1)        # (H, H+NC)
    return p


# ----------------------------- main --------------------------------------------
if __name__ == "__main__":
    root = jax.random.PRNGKey(0)
    k_param, k_tok, k_seg = jax.random.split(root, 3)

    params = init_params(k_param)

    token_ids = jax.random.randint(k_tok, (BATCH, SEQ), 0, VOCAB, dtype=jnp.int32)
    segment_ids = jax.random.randint(k_seg, (BATCH, SEQ), 0, SEGMENTS, dtype=jnp.int32)
    position_ids = jnp.broadcast_to(jnp.arange(SEQ, dtype=jnp.int32)[None, :], (BATCH, SEQ))
    # 1 = padding position (gets mask * -10000 added to attention scores)
    attn_mask = jnp.zeros((BATCH, SEQ), jnp.float32).at[1, SEQ - 2:].set(1.0)

    logits = bert_forward(params, token_ids, segment_ids, position_ids, attn_mask)
    jax.block_until_ready(logits)
    assert logits.shape == (BATCH, NUM_CLASSES)
    print("KERNEL_OK")
</pallas_src>

<mosaic_0001>
module attributes {stable_mosaic.version = 11 : i64} {
  func.func @bert_kernel(%arg0: memref<16x32xf32, #tpu.memory_space<vmem>>, %arg1: memref<16x16xf32, #tpu.memory_space<vmem>>, %arg2: memref<2x32x96xf32, #tpu.memory_space<vmem>>, %arg3: memref<2x32x32xf32, #tpu.memory_space<vmem>>, %arg4: memref<2x32x64xf32, #tpu.memory_space<vmem>>, %arg5: memref<2x64x32xf32, #tpu.memory_space<vmem>>, %arg6: memref<2x2x96xf32, #tpu.memory_space<vmem>>, %arg7: memref<2x6x32xf32, #tpu.memory_space<vmem>>, %arg8: memref<4x32xf32, #tpu.memory_space<vmem>>, %arg9: memref<32x34xf32, #tpu.memory_space<vmem>>, %arg10: memref<2x2xf32, #tpu.memory_space<vmem>>) attributes {dimension_semantics = [], scalar_prefetch = 0 : i64, scratch_operands = 0 : i64, tpu.core_type = #tpu.core_type<tc>} {
    %c0 = arith.constant 0 : index
    %c0_0 = arith.constant 0 : index
    %0 = vector.load %arg8[%c0, %c0_0] : memref<4x32xf32, #tpu.memory_space<vmem>>, vector<4x32xf32>
    %c0_1 = arith.constant 0 : index
    %c0_2 = arith.constant 0 : index
    %1 = vector.load %arg0[%c0_1, %c0_2] : memref<16x32xf32, #tpu.memory_space<vmem>>, vector<16x32xf32>
    %2 = vector.extract_strided_slice %0 {offsets = [0, 0], sizes = [1, 32], strides = [1, 1]} : vector<4x32xf32> to vector<1x32xf32>
    %3 = vector.extract_strided_slice %0 {offsets = [1, 0], sizes = [1, 32], strides = [1, 1]} : vector<4x32xf32> to vector<1x32xf32>
    %cst = arith.constant dense<0.000000e+00> : vector<16xf32>
    %4 = vector.multi_reduction <add>, %1, %cst [1] : vector<16x32xf32> to vector<16xf32>
    %5 = vector.shape_cast %4 : vector<16xf32> to vector<16x1xf32>
    %cst_3 = arith.constant 3.200000e+01 : f32
    %6 = vector.broadcast %cst_3 : f32 to vector<16x1xf32>
    %7 = arith.divf %5, %6 : vector<16x1xf32>
    %8 = vector.broadcast %7 : vector<16x1xf32> to vector<16x32xf32>
    %9 = arith.subf %1, %8 : vector<16x32xf32>
    %10 = arith.mulf %9, %9 : vector<16x32xf32>
    %cst_4 = arith.constant dense<0.000000e+00> : vector<16xf32>
    %11 = vector.multi_reduction <add>, %10, %cst_4 [1] : vector<16x32xf32> to vector<16xf32>
    %12 = vector.shape_cast %11 : vector<16xf32> to vector<16x1xf32>
    %cst_5 = arith.constant 3.200000e+01 : f32
    %13 = vector.broadcast %cst_5 : f32 to vector<16x1xf32>
    %14 = arith.divf %12, %13 : vector<16x1xf32>
    %15 = vector.broadcast %7 : vector<16x1xf32> to vector<16x32xf32>
    %16 = arith.subf %1, %15 : vector<16x32xf32>
    %cst_6 = arith.constant 9.99999974E-6 : f32
    %17 = vector.broadcast %cst_6 : f32 to vector<16x1xf32>
    %18 = arith.addf %14, %17 : vector<16x1xf32>
    %19 = math.rsqrt %18 : vector<16x1xf32>
    %20 = vector.broadcast %19 : vector<16x1xf32> to vector<16x32xf32>
    %21 = arith.mulf %16, %20 : vector<16x32xf32>
    %22 = vector.broadcast %2 : vector<1x32xf32> to vector<16x32xf32>
    %23 = arith.mulf %21, %22 : vector<16x32xf32>
    %24 = vector.broadcast %3 : vector<1x32xf32> to vector<16x32xf32>
    %25 = arith.addf %23, %24 : vector<16x32xf32>
    %c0_7 = arith.constant 0 : index
    %c0_8 = arith.constant 0 : index
    %26 = vector.load %arg1[%c0_7, %c0_8] : memref<16x16xf32, #tpu.memory_space<vmem>>, vector<16x16xf32>
    %27 = tpu.concatenate %26, %26, %26, %26 in 0 : vector<16x16xf32>, vector<16x16xf32>, vector<16x16xf32>, vector<16x16xf32> -> vector<64x16xf32>
    %c0_9 = arith.constant 0 : index
    %c0_10 = arith.constant 0 : index
    %c0_11 = arith.constant 0 : index
    %28 = vector.load %arg7[%c0_9, %c0_10, %c0_11] : memref<2x6x32xf32, #tpu.memory_space<vmem>>, vector<1x6x32xf32>
    %29 = vector.shape_cast %28 : vector<1x6x32xf32> to vector<6x32xf32>
    %c0_12 = arith.constant 0 : index
    %c0_13 = arith.constant 0 : index
    %c0_14 = arith.constant 0 : index
    %30 = vector.load %arg6[%c0_12, %c0_13, %c0_14] : memref<2x2x96xf32, #tpu.memory_space<vmem>>, vector<1x2x96xf32>
    %31 = vector.shape_cast %30 : vector<1x2x96xf32> to vector<2x96xf32>
    %32 = vector.extract_strided_slice %31 {offsets = [0, 0], sizes = [1, 96], strides = [1, 1]} : vector<2x96xf32> to vector<1x96xf32>
    %33 = vector.extract_strided_slice %31 {offsets = [1, 0], sizes = [1, 64], strides = [1, 1]} : vector<2x96xf32> to vector<1x64xf32>
    %c0_15 = arith.constant 0 : index
    %c0_16 = arith.constant 0 : index
    %c0_17 = arith.constant 0 : index
    %34 = vector.load %arg2[%c0_15, %c0_16, %c0_17] : memref<2x32x96xf32, #tpu.memory_space<vmem>>, vector<1x32x96xf32>
    %35 = vector.shape_cast %34 : vector<1x32x96xf32> to vector<32x96xf32>
    %cst_18 = arith.constant dense<0.000000e+00> : vector<16x96xf32>
    %36 = tpu.matmul %25, %35, %cst_18 {dimension_numbers = #tpu.dot_dimension_numbers<[1], [0], [0], [1], [0, 0, 1, 1], [], []>} : vector<16x32xf32>, vector<32x96xf32>, vector<16x96xf32> -> vector<16x96xf32>
    %37 = vector.broadcast %32 : vector<1x96xf32> to vector<16x96xf32>
    %38 = arith.addf %36, %37 : vector<16x96xf32>
    %39 = vector.extract_strided_slice %38 {offsets = [0, 0], sizes = [16, 32], strides = [1, 1]} : vector<16x96xf32> to vector<16x32xf32>
    %40 = vector.extract_strided_slice %38 {offsets = [0, 32], sizes = [16, 32], strides = [1, 1]} : vector<16x96xf32> to vector<16x32xf32>
    %41 = vector.extract_strided_slice %38 {offsets = [0, 64], sizes = [16, 32], strides = [1, 1]} : vector<16x96xf32> to vector<16x32xf32>
    %42 = vector.extract_strided_slice %39 {offsets = [0, 0], sizes = [16, 8], strides = [1, 1]} : vector<16x32xf32> to vector<16x8xf32>
    %43 = vector.extract_strided_slice %40 {offsets = [0, 0], sizes = [16, 8], strides = [1, 1]} : vector<16x32xf32> to vector<16x8xf32>
    %cst_19 = arith.constant dense<0.000000e+00> : vector<16x16xf32>
    %44 = tpu.matmul %42, %43, %cst_19 {dimension_numbers = #tpu.dot_dimension_numbers<[1], [1], [0], [0], [0, 0, 1, 0], [], []>} : vector<16x8xf32>, vector<16x8xf32>, vector<16x16xf32> -> vector<16x16xf32>
    %45 = vector.extract_strided_slice %39 {offsets = [0, 8], sizes = [16, 8], strides = [1, 1]} : vector<16x32xf32> to vector<16x8xf32>
    %46 = vector.extract_strided_slice %40 {offsets = [0, 8], sizes = [16, 8], strides = [1, 1]} : vector<16x32xf32> to vector<16x8xf32>
    %cst_20 = arith.constant dense<0.000000e+00> : vector<16x16xf32>
    %47 = tpu.matmul %45, %46, %cst_20 {dimension_numbers = #tpu.dot_dimension_numbers<[1], [1], [0], [0], [0, 0, 1, 0], [], []>} : vector<16x8xf32>, vector<16x8xf32>, vector<16x16xf32> -> vector<16x16xf32>
    %48 = vector.extract_strided_slice %39 {offsets = [0, 16], sizes = [16, 8], strides = [1, 1]} : vector<16x32xf32> to vector<16x8xf32>
    %49 = vector.extract_strided_slice %40 {offsets = [0, 16], sizes = [16, 8], strides = [1, 1]} : vector<16x32xf32> to vector<16x8xf32>
    %cst_21 = arith.constant dense<0.000000e+00> : vector<16x16xf32>
    %50 = tpu.matmul %48, %49, %cst_21 {dimension_numbers = #tpu.dot_dimension_numbers<[1], [1], [0], [0], [0, 0, 1, 0], [], []>} : vector<16x8xf32>, vector<16x8xf32>, vector<16x16xf32> -> vector<16x16xf32>
    %51 = vector.extract_strided_slice %39 {offsets = [0, 24], sizes = [16, 8], strides = [1, 1]} : vector<16x32xf32> to vector<16x8xf32>
    %52 = vector.extract_strided_slice %40 {offsets = [0, 24], sizes = [16, 8], strides = [1, 1]} : vector<16x32xf32> to vector<16x8xf32>
    %cst_22 = arith.constant dense<0.000000e+00> : vector<16x16xf32>
    %53 = tpu.matmul %51, %52, %cst_22 {dimension_numbers = #tpu.dot_dimension_numbers<[1], [1], [0], [0], [0, 0, 1, 0], [], []>} : vector<16x8xf32>, vector<16x8xf32>, vector<16x16xf32> -> vector<16x16xf32>
    %54 = tpu.concatenate %44, %47, %50, %53 in 0 : vector<16x16xf32>, vector<16x16xf32>, vector<16x16xf32>, vector<16x16xf32> -> vector<64x16xf32>
    %cst_23 = arith.constant 0.353553385 : f32
    %55 = vector.broadcast %cst_23 : f32 to vector<64x16xf32>
    %56 = arith.mulf %54, %55 : vector<64x16xf32>
    %57 = arith.addf %56, %27 : vector<64x16xf32>
    %cst_24 = arith.constant dense<0xFF800000> : vector<64xf32>
    %58 = vector.multi_reduction <maximumf>, %57, %cst_24 [1] : vector<64x16xf32> to vector<64xf32>
    %59 = vector.shape_cast %58 : vector<64xf32> to vector<64x1xf32>
    %60 = vector.broadcast %59 : vector<64x1xf32> to vector<64x16xf32>
    %61 = arith.subf %57, %60 : vector<64x16xf32>
    %62 = math.exp %61 : vector<64x16xf32>
    %cst_25 = arith.constant dense<0.000000e+00> : vector<64xf32>
    %63 = vector.multi_reduction <add>, %62, %cst_25 [1] : vector<64x16xf32> to vector<64xf32>
    %64 = vector.shape_cast %63 : vector<64xf32> to vector<64x1xf32>
    %65 = tpu.reciprocal %64 : vector<64x1xf32> -> vector<64x1xf32>
    %66 = vector.broadcast %65 : vector<64x1xf32> to vector<64x16xf32>
    %67 = arith.mulf %62, %66 : vector<64x16xf32>
    %68 = vector.extract_strided_slice %67 {offsets = [0, 0], sizes = [16, 16], strides = [1, 1]} : vector<64x16xf32> to vector<16x16xf32>
    %69 = vector.extract_strided_slice %41 {offsets = [0, 0], sizes = [16, 8], strides = [1, 1]} : vector<16x32xf32> to vector<16x8xf32>
    %cst_26 = arith.constant dense<0.000000e+00> : vector<16x8xf32>
    %70 = tpu.matmul %68, %69, %cst_26 {dimension_numbers = #tpu.dot_dimension_numbers<[1], [0], [0], [1], [0, 0, 1, 1], [], []>} : vector<16x16xf32>, vector<16x8xf32>, vector<16x8xf32> -> vector<16x8xf32>
    %71 = vector.extract_strided_slice %67 {offsets = [16, 0], sizes = [16, 16], strides = [1, 1]} : vector<64x16xf32> to vector<16x16xf32>
    %72 = vector.extract_strided_slice %41 {offsets = [0, 8], sizes = [16, 8], strides = [1, 1]} : vector<16x32xf32> to vector<16x8xf32>
    %cst_27 = arith.constant dense<0.000000e+00> : vector<16x8xf32>
    %73 = tpu.matmul %71, %72, %cst_27 {dimension_numbers = #tpu.dot_dimension_numbers<[1], [0], [0], [1], [0, 0, 1, 1], [], []>} : vector<16x16xf32>, vector<16x8xf32>, vector<16x8xf32> -> vector<16x8xf32>
    %74 = vector.extract_strided_slice %67 {offsets = [32, 0], sizes = [16, 16], strides = [1, 1]} : vector<64x16xf32> to vector<16x16xf32>
    %75 = vector.extract_strided_slice %41 {offsets = [0, 16], sizes = [16, 8], strides = [1, 1]} : vector<16x32xf32> to vector<16x8xf32>
    %cst_28 = arith.constant dense<0.000000e+00> : vector<16x8xf32>
    %76 = tpu.matmul %74, %75, %cst_28 {dimension_numbers = #tpu.dot_dimension_numbers<[1], [0], [0], [1], [0, 0, 1, 1], [], []>} : vector<16x16xf32>, vector<16x8xf32>, vector<16x8xf32> -> vector<16x8xf32>
    %77 = vector.extract_strided_slice %67 {offsets = [48, 0], sizes = [16, 16], strides = [1, 1]} : vector<64x16xf32> to vector<16x16xf32>
    %78 = vector.extract_strided_slice %41 {offsets = [0, 24], sizes = [16, 8], strides = [1, 1]} : vector<16x32xf32> to vector<16x8xf32>
    %cst_29 = arith.constant dense<0.000000e+00> : vector<16x8xf32>
    %79 = tpu.matmul %77, %78, %cst_29 {dimension_numbers = #tpu.dot_dimension_numbers<[1], [0], [0], [1], [0, 0, 1, 1], [], []>} : vector<16x16xf32>, vector<16x8xf32>, vector<16x8xf32> -> vector<16x8xf32>
    %80 = tpu.concatenate %70, %73, %76, %79 in 1 : vector<16x8xf32>, vector<16x8xf32>, vector<16x8xf32>, vector<16x8xf32> -> vector<16x32xf32>
    %c0_30 = arith.constant 0 : index
    %c0_31 = arith.constant 0 : index
    %c0_32 = arith.constant 0 : index
    %81 = vector.load %arg3[%c0_30, %c0_31, %c0_32] : memref<2x32x32xf32, #tpu.memory_space<vmem>>, vector<1x32x32xf32>
    %82 = vector.shape_cast %81 : vector<1x32x32xf32> to vector<32x32xf32>
    %cst_33 = arith.constant dense<0.000000e+00> : vector<16x32xf32>
    %83 = tpu.matmul %80, %82, %cst_33 {dimension_numbers = #tpu.dot_dimension_numbers<[1], [0], [0], [1], [0, 0, 1, 1], [], []>} : vector<16x32xf32>, vector<32x32xf32>, vector<16x32xf32> -> vector<16x32xf32>
    %84 = vector.extract_strided_slice %29 {offsets = [0, 0], sizes = [1, 32], strides = [1, 1]} : vector<6x32xf32> to vector<1x32xf32>
    %85 = vector.broadcast %84 : vector<1x32xf32> to vector<16x32xf32>
    %86 = arith.addf %83, %85 : vector<16x32xf32>
    %87 = arith.addf %25, %86 : vector<16x32xf32>
    %88 = vector.extract_strided_slice %29 {offsets = [1, 0], sizes = [1, 32], strides = [1, 1]} : vector<6x32xf32> to vector<1x32xf32>
    %89 = vector.extract_strided_slice %29 {offsets = [2, 0], sizes = [1, 32], strides = [1, 1]} : vector<6x32xf32> to vector<1x32xf32>
    %cst_34 = arith.constant dense<0.000000e+00> : vector<16xf32>
    %90 = vector.multi_reduction <add>, %87, %cst_34 [1] : vector<16x32xf32> to vector<16xf32>
    %91 = vector.shape_cast %90 : vector<16xf32> to vector<16x1xf32>
    %cst_35 = arith.constant 3.200000e+01 : f32
    %92 = vector.broadcast %cst_35 : f32 to vector<16x1xf32>
    %93 = arith.divf %91, %92 : vector<16x1xf32>
    %94 = vector.broadcast %93 : vector<16x1xf32> to vector<16x32xf32>
    %95 = arith.subf %87, %94 : vector<16x32xf32>
    %96 = arith.mulf %95, %95 : vector<16x32xf32>
    %cst_36 = arith.constant dense<0.000000e+00> : vector<16xf32>
    %97 = vector.multi_reduction <add>, %96, %cst_36 [1] : vector<16x32xf32> to vector<16xf32>
    %98 = vector.shape_cast %97 : vector<16xf32> to vector<16x1xf32>
    %cst_37 = arith.constant 3.200000e+01 : f32
    %99 = vector.broadcast %cst_37 : f32 to vector<16x1xf32>
    %100 = arith.divf %98, %99 : vector<16x1xf32>
    %101 = vector.broadcast %93 : vector<16x1xf32> to vector<16x32xf32>
    %102 = arith.subf %87, %101 : vector<16x32xf32>
    %cst_38 = arith.constant 9.99999974E-6 : f32
    %103 = vector.broadcast %cst_38 : f32 to vector<16x1xf32>
    %104 = arith.addf %100, %103 : vector<16x1xf32>
    %105 = math.rsqrt %104 : vector<16x1xf32>
    %106 = vector.broadcast %105 : vector<16x1xf32> to vector<16x32xf32>
    %107 = arith.mulf %102, %106 : vector<16x32xf32>
    %108 = vector.broadcast %88 : vector<1x32xf32> to vector<16x32xf32>
    %109 = arith.mulf %107, %108 : vector<16x32xf32>
    %110 = vector.broadcast %89 : vector<1x32xf32> to vector<16x32xf32>
    %111 = arith.addf %109, %110 : vector<16x32xf32>
    %c0_39 = arith.constant 0 : index
    %c0_40 = arith.constant 0 : index
    %c0_41 = arith.constant 0 : index
    %112 = vector.load %arg4[%c0_39, %c0_40, %c0_41] : memref<2x32x64xf32, #tpu.memory_space<vmem>>, vector<1x32x64xf32>
    %113 = vector.shape_cast %112 : vector<1x32x64xf32> to vector<32x64xf32>
    %cst_42 = arith.constant dense<0.000000e+00> : vector<16x64xf32>
    %114 = tpu.matmul %111, %113, %cst_42 {dimension_numbers = #tpu.dot_dimension_numbers<[1], [0], [0], [1], [0, 0, 1, 1], [], []>} : vector<16x32xf32>, vector<32x64xf32>, vector<16x64xf32> -> vector<16x64xf32>
    %115 = vector.broadcast %33 : vector<1x64xf32> to vector<16x64xf32>
    %116 = arith.addf %114, %115 : vector<16x64xf32>
    %cst_43 = arith.constant 5.000000e-01 : f32
    %117 = vector.broadcast %cst_43 : f32 to vector<16x64xf32>
    %118 = arith.mulf %117, %116 : vector<16x64xf32>
    %119 = arith.mulf %116, %116 : vector<16x64xf32>
    %120 = arith.mulf %116, %119 : vector<16x64xf32>
    %cst_44 = arith.constant 4.471500e-02 : f32
    %121 = vector.broadcast %cst_44 : f32 to vector<16x64xf32>
    %122 = arith.mulf %121, %120 : vector<16x64xf32>
    %123 = arith.addf %116, %122 : vector<16x64xf32>
    %cst_45 = arith.constant 0.797884583 : f32
    %124 = vector.broadcast %cst_45 : f32 to vector<16x64xf32>
    %125 = arith.mulf %124, %123 : vector<16x64xf32>
    %126 = math.tanh %125 : vector<16x64xf32>
    %cst_46 = arith.constant 1.000000e+00 : f32
    %127 = vector.broadcast %cst_46 : f32 to vector<16x64xf32>
    %128 = arith.addf %127, %126 : vector<16x64xf32>
    %129 = arith.mulf %118, %128 : vector<16x64xf32>
    %c0_47 = arith.constant 0 : index
    %c0_48 = arith.constant 0 : index
    %c0_49 = arith.constant 0 : index
    %130 = vector.load %arg5[%c0_47, %c0_48, %c0_49] : memref<2x64x32xf32, #tpu.memory_space<vmem>>, vector<1x64x32xf32>
    %131 = vector.shape_cast %130 : vector<1x64x32xf32> to vector<64x32xf32>
    %cst_50 = arith.constant dense<0.000000e+00> : vector<16x32xf32>
    %132 = tpu.matmul %129, %131, %cst_50 {dimension_numbers = #tpu.dot_dimension_numbers<[1], [0], [0], [1], [0, 0, 1, 1], [], []>} : vector<16x64xf32>, vector<64x32xf32>, vector<16x32xf32> -> vector<16x32xf32>
    %133 = vector.extract_strided_slice %29 {offsets = [3, 0], sizes = [1, 32], strides = [1, 1]} : vector<6x32xf32> to vector<1x32xf32>
    %134 = vector.broadcast %133 : vector<1x32xf32> to vector<16x32xf32>
    %135 = arith.addf %132, %134 : vector<16x32xf32>
    %136 = arith.addf %111, %135 : vector<16x32xf32>
    %137 = vector.extract_strided_slice %29 {offsets = [4, 0], sizes = [1, 32], strides = [1, 1]} : vector<6x32xf32> to vector<1x32xf32>
    %138 = vector.extract_strided_slice %29 {offsets = [5, 0], sizes = [1, 32], strides = [1, 1]} : vector<6x32xf32> to vector<1x32xf32>
    %cst_51 = arith.constant dense<0.000000e+00> : vector<16xf32>
    %139 = vector.multi_reduction <add>, %136, %cst_51 [1] : vector<16x32xf32> to vector<16xf32>
    %140 = vector.shape_cast %139 : vector<16xf32> to vector<16x1xf32>
    %cst_52 = arith.constant 3.200000e+01 : f32
    %141 = vector.broadcast %cst_52 : f32 to vector<16x1xf32>
    %142 = arith.divf %140, %141 : vector<16x1xf32>
    %143 = vector.broadcast %142 : vector<16x1xf32> to vector<16x32xf32>
    %144 = arith.subf %136, %143 : vector<16x32xf32>
    %145 = arith.mulf %144, %144 : vector<16x32xf32>
    %cst_53 = arith.constant dense<0.000000e+00> : vector<16xf32>
    %146 = vector.multi_reduction <add>, %145, %cst_53 [1] : vector<16x32xf32> to vector<16xf32>
    %147 = vector.shape_cast %146 : vector<16xf32> to vector<16x1xf32>
    %cst_54 = arith.constant 3.200000e+01 : f32
    %148 = vector.broadcast %cst_54 : f32 to vector<16x1xf32>
    %149 = arith.divf %147, %148 : vector<16x1xf32>
    %150 = vector.broadcast %142 : vector<16x1xf32> to vector<16x32xf32>
    %151 = arith.subf %136, %150 : vector<16x32xf32>
    %cst_55 = arith.constant 9.99999974E-6 : f32
    %152 = vector.broadcast %cst_55 : f32 to vector<16x1xf32>
    %153 = arith.addf %149, %152 : vector<16x1xf32>
    %154 = math.rsqrt %153 : vector<16x1xf32>
    %155 = vector.broadcast %154 : vector<16x1xf32> to vector<16x32xf32>
    %156 = arith.mulf %151, %155 : vector<16x32xf32>
    %157 = vector.broadcast %137 : vector<1x32xf32> to vector<16x32xf32>
    %158 = arith.mulf %156, %157 : vector<16x32xf32>
    %159 = vector.broadcast %138 : vector<1x32xf32> to vector<16x32xf32>
    %160 = arith.addf %158, %159 : vector<16x32xf32>
    %c1 = arith.constant 1 : index
    %c0_56 = arith.constant 0 : index
    %c0_57 = arith.constant 0 : index
    %161 = vector.load %arg7[%c1, %c0_56, %c0_57] : memref<2x6x32xf32, #tpu.memory_space<vmem>>, vector<1x6x32xf32>
    %162 = vector.shape_cast %161 : vector<1x6x32xf32> to vector<6x32xf32>
    %c1_58 = arith.constant 1 : index
    %c0_59 = arith.constant 0 : index
    %c0_60 = arith.constant 0 : index
    %163 = vector.load %arg6[%c1_58, %c0_59, %c0_60] : memref<2x2x96xf32, #tpu.memory_space<vmem>>, vector<1x2x96xf32>
    %164 = vector.shape_cast %163 : vector<1x2x96xf32> to vector<2x96xf32>
    %165 = vector.extract_strided_slice %164 {offsets = [0, 0], sizes = [1, 96], strides = [1, 1]} : vector<2x96xf32> to vector<1x96xf32>
    %166 = vector.extract_strided_slice %164 {offsets = [1, 0], sizes = [1, 64], strides = [1, 1]} : vector<2x96xf32> to vector<1x64xf32>
    %c1_61 = arith.constant 1 : index
    %c0_62 = arith.constant 0 : index
    %c0_63 = arith.constant 0 : index
    %167 = vector.load %arg2[%c1_61, %c0_62, %c0_63] : memref<2x32x96xf32, #tpu.memory_space<vmem>>, vector<1x32x96xf32>
    %168 = vector.shape_cast %167 : vector<1x32x96xf32> to vector<32x96xf32>
    %cst_64 = arith.constant dense<0.000000e+00> : vector<16x96xf32>
    %169 = tpu.matmul %160, %168, %cst_64 {dimension_numbers = #tpu.dot_dimension_numbers<[1], [0], [0], [1], [0, 0, 1, 1], [], []>} : vector<16x32xf32>, vector<32x96xf32>, vector<16x96xf32> -> vector<16x96xf32>
    %170 = vector.broadcast %165 : vector<1x96xf32> to vector<16x96xf32>
    %171 = arith.addf %169, %170 : vector<16x96xf32>
    %172 = vector.extract_strided_slice %171 {offsets = [0, 0], sizes = [16, 32], strides = [1, 1]} : vector<16x96xf32> to vector<16x32xf32>
    %173 = vector.extract_strided_slice %171 {offsets = [0, 32], sizes = [16, 32], strides = [1, 1]} : vector<16x96xf32> to vector<16x32xf32>
    %174 = vector.extract_strided_slice %171 {offsets = [0, 64], sizes = [16, 32], strides = [1, 1]} : vector<16x96xf32> to vector<16x32xf32>
    %175 = vector.extract_strided_slice %172 {offsets = [0, 0], sizes = [16, 8], strides = [1, 1]} : vector<16x32xf32> to vector<16x8xf32>
    %176 = vector.extract_strided_slice %173 {offsets = [0, 0], sizes = [16, 8], strides = [1, 1]} : vector<16x32xf32> to vector<16x8xf32>
    %cst_65 = arith.constant dense<0.000000e+00> : vector<16x16xf32>
    %177 = tpu.matmul %175, %176, %cst_65 {dimension_numbers = #tpu.dot_dimension_numbers<[1], [1], [0], [0], [0, 0, 1, 0], [], []>} : vector<16x8xf32>, vector<16x8xf32>, vector<16x16xf32> -> vector<16x16xf32>
    %178 = vector.extract_strided_slice %172 {offsets = [0, 8], sizes = [16, 8], strides = [1, 1]} : vector<16x32xf32> to vector<16x8xf32>
    %179 = vector.extract_strided_slice %173 {offsets = [0, 8], sizes = [16, 8], strides = [1, 1]} : vector<16x32xf32> to vector<16x8xf32>
    %cst_66 = arith.constant dense<0.000000e+00> : vector<16x16xf32>
    %180 = tpu.matmul %178, %179, %cst_66 {dimension_numbers = #tpu.dot_dimension_numbers<[1], [1], [0], [0], [0, 0, 1, 0], [], []>} : vector<16x8xf32>, vector<16x8xf32>, vector<16x16xf32> -> vector<16x16xf32>
    %181 = vector.extract_strided_slice %172 {offsets = [0, 16], sizes = [16, 8], strides = [1, 1]} : vector<16x32xf32> to vector<16x8xf32>
    %182 = vector.extract_strided_slice %173 {offsets = [0, 16], sizes = [16, 8], strides = [1, 1]} : vector<16x32xf32> to vector<16x8xf32>
    %cst_67 = arith.constant dense<0.000000e+00> : vector<16x16xf32>
    %183 = tpu.matmul %181, %182, %cst_67 {dimension_numbers = #tpu.dot_dimension_numbers<[1], [1], [0], [0], [0, 0, 1, 0], [], []>} : vector<16x8xf32>, vector<16x8xf32>, vector<16x16xf32> -> vector<16x16xf32>
    %184 = vector.extract_strided_slice %172 {offsets = [0, 24], sizes = [16, 8], strides = [1, 1]} : vector<16x32xf32> to vector<16x8xf32>
    %185 = vector.extract_strided_slice %173 {offsets = [0, 24], sizes = [16, 8], strides = [1, 1]} : vector<16x32xf32> to vector<16x8xf32>
    %cst_68 = arith.constant dense<0.000000e+00> : vector<16x16xf32>
    %186 = tpu.matmul %184, %185, %cst_68 {dimension_numbers = #tpu.dot_dimension_numbers<[1], [1], [0], [0], [0, 0, 1, 0], [], []>} : vector<16x8xf32>, vector<16x8xf32>, vector<16x16xf32> -> vector<16x16xf32>
    %187 = tpu.concatenate %177, %180, %183, %186 in 0 : vector<16x16xf32>, vector<16x16xf32>, vector<16x16xf32>, vector<16x16xf32> -> vector<64x16xf32>
    %cst_69 = arith.constant 0.353553385 : f32
    %188 = vector.broadcast %cst_69 : f32 to vector<64x16xf32>
    %189 = arith.mulf %187, %188 : vector<64x16xf32>
    %190 = arith.addf %189, %27 : vector<64x16xf32>
    %cst_70 = arith.constant dense<0xFF800000> : vector<64xf32>
    %191 = vector.multi_reduction <maximumf>, %190, %cst_70 [1] : vector<64x16xf32> to vector<64xf32>
    %192 = vector.shape_cast %191 : vector<64xf32> to vector<64x1xf32>
    %193 = vector.broadcast %192 : vector<64x1xf32> to vector<64x16xf32>
    %194 = arith.subf %190, %193 : vector<64x16xf32>
    %195 = math.exp %194 : vector<64x16xf32>
    %cst_71 = arith.constant dense<0.000000e+00> : vector<64xf32>
    %196 = vector.multi_reduction <add>, %195, %cst_71 [1] : vector<64x16xf32> to vector<64xf32>
    %197 = vector.shape_cast %196 : vector<64xf32> to vector<64x1xf32>
    %198 = tpu.reciprocal %197 : vector<64x1xf32> -> vector<64x1xf32>
    %199 = vector.broadcast %198 : vector<64x1xf32> to vector<64x16xf32>
    %200 = arith.mulf %195, %199 : vector<64x16xf32>
    %201 = vector.extract_strided_slice %200 {offsets = [0, 0], sizes = [16, 16], strides = [1, 1]} : vector<64x16xf32> to vector<16x16xf32>
    %202 = vector.extract_strided_slice %174 {offsets = [0, 0], sizes = [16, 8], strides = [1, 1]} : vector<16x32xf32> to vector<16x8xf32>
    %cst_72 = arith.constant dense<0.000000e+00> : vector<16x8xf32>
    %203 = tpu.matmul %201, %202, %cst_72 {dimension_numbers = #tpu.dot_dimension_numbers<[1], [0], [0], [1], [0, 0, 1, 1], [], []>} : vector<16x16xf32>, vector<16x8xf32>, vector<16x8xf32> -> vector<16x8xf32>
    %204 = vector.extract_strided_slice %200 {offsets = [16, 0], sizes = [16, 16], strides = [1, 1]} : vector<64x16xf32> to vector<16x16xf32>
    %205 = vector.extract_strided_slice %174 {offsets = [0, 8], sizes = [16, 8], strides = [1, 1]} : vector<16x32xf32> to vector<16x8xf32>
    %cst_73 = arith.constant dense<0.000000e+00> : vector<16x8xf32>
    %206 = tpu.matmul %204, %205, %cst_73 {dimension_numbers = #tpu.dot_dimension_numbers<[1], [0], [0], [1], [0, 0, 1, 1], [], []>} : vector<16x16xf32>, vector<16x8xf32>, vector<16x8xf32> -> vector<16x8xf32>
    %207 = vector.extract_strided_slice %200 {offsets = [32, 0], sizes = [16, 16], strides = [1, 1]} : vector<64x16xf32> to vector<16x16xf32>
    %208 = vector.extract_strided_slice %174 {offsets = [0, 16], sizes = [16, 8], strides = [1, 1]} : vector<16x32xf32> to vector<16x8xf32>
    %cst_74 = arith.constant dense<0.000000e+00> : vector<16x8xf32>
    %209 = tpu.matmul %207, %208, %cst_74 {dimension_numbers = #tpu.dot_dimension_numbers<[1], [0], [0], [1], [0, 0, 1, 1], [], []>} : vector<16x16xf32>, vector<16x8xf32>, vector<16x8xf32> -> vector<16x8xf32>
    %210 = vector.extract_strided_slice %200 {offsets = [48, 0], sizes = [16, 16], strides = [1, 1]} : vector<64x16xf32> to vector<16x16xf32>
    %211 = vector.extract_strided_slice %174 {offsets = [0, 24], sizes = [16, 8], strides = [1, 1]} : vector<16x32xf32> to vector<16x8xf32>
    %cst_75 = arith.constant dense<0.000000e+00> : vector<16x8xf32>
    %212 = tpu.matmul %210, %211, %cst_75 {dimension_numbers = #tpu.dot_dimension_numbers<[1], [0], [0], [1], [0, 0, 1, 1], [], []>} : vector<16x16xf32>, vector<16x8xf32>, vector<16x8xf32> -> vector<16x8xf32>
    %213 = tpu.concatenate %203, %206, %209, %212 in 1 : vector<16x8xf32>, vector<16x8xf32>, vector<16x8xf32>, vector<16x8xf32> -> vector<16x32xf32>
    %c1_76 = arith.constant 1 : index
    %c0_77 = arith.constant 0 : index
    %c0_78 = arith.constant 0 : index
    %214 = vector.load %arg3[%c1_76, %c0_77, %c0_78] : memref<2x32x32xf32, #tpu.memory_space<vmem>>, vector<1x32x32xf32>
    %215 = vector.shape_cast %214 : vector<1x32x32xf32> to vector<32x32xf32>
    %cst_79 = arith.constant dense<0.000000e+00> : vector<16x32xf32>
    %216 = tpu.matmul %213, %215, %cst_79 {dimension_numbers = #tpu.dot_dimension_numbers<[1], [0], [0], [1], [0, 0, 1, 1], [], []>} : vector<16x32xf32>, vector<32x32xf32>, vector<16x32xf32> -> vector<16x32xf32>
    %217 = vector.extract_strided_slice %162 {offsets = [0, 0], sizes = [1, 32], strides = [1, 1]} : vector<6x32xf32> to vector<1x32xf32>
    %218 = vector.broadcast %217 : vector<1x32xf32> to vector<16x32xf32>
    %219 = arith.addf %216, %218 : vector<16x32xf32>
    %220 = arith.addf %160, %219 : vector<16x32xf32>
    %221 = vector.extract_strided_slice %162 {offsets = [1, 0], sizes = [1, 32], strides = [1, 1]} : vector<6x32xf32> to vector<1x32xf32>
    %222 = vector.extract_strided_slice %162 {offsets = [2, 0], sizes = [1, 32], strides = [1, 1]} : vector<6x32xf32> to vector<1x32xf32>
    %cst_80 = arith.constant dense<0.000000e+00> : vector<16xf32>
    %223 = vector.multi_reduction <add>, %220, %cst_80 [1] : vector<16x32xf32> to vector<16xf32>
    %224 = vector.shape_cast %223 : vector<16xf32> to vector<16x1xf32>
    %cst_81 = arith.constant 3.200000e+01 : f32
    %225 = vector.broadcast %cst_81 : f32 to vector<16x1xf32>
    %226 = arith.divf %224, %225 : vector<16x1xf32>
    %227 = vector.broadcast %226 : vector<16x1xf32> to vector<16x32xf32>
    %228 = arith.subf %220, %227 : vector<16x32xf32>
    %229 = arith.mulf %228, %228 : vector<16x32xf32>
    %cst_82 = arith.constant dense<0.000000e+00> : vector<16xf32>
    %230 = vector.multi_reduction <add>, %229, %cst_82 [1] : vector<16x32xf32> to vector<16xf32>
    %231 = vector.shape_cast %230 : vector<16xf32> to vector<16x1xf32>
    %cst_83 = arith.constant 3.200000e+01 : f32
    %232 = vector.broadcast %cst_83 : f32 to vector<16x1xf32>
    %233 = arith.divf %231, %232 : vector<16x1xf32>
    %234 = vector.broadcast %226 : vector<16x1xf32> to vector<16x32xf32>
    %235 = arith.subf %220, %234 : vector<16x32xf32>
    %cst_84 = arith.constant 9.99999974E-6 : f32
    %236 = vector.broadcast %cst_84 : f32 to vector<16x1xf32>
    %237 = arith.addf %233, %236 : vector<16x1xf32>
    %238 = math.rsqrt %237 : vector<16x1xf32>
    %239 = vector.broadcast %238 : vector<16x1xf32> to vector<16x32xf32>
    %240 = arith.mulf %235, %239 : vector<16x32xf32>
    %241 = vector.broadcast %221 : vector<1x32xf32> to vector<16x32xf32>
    %242 = arith.mulf %240, %241 : vector<16x32xf32>
    %243 = vector.broadcast %222 : vector<1x32xf32> to vector<16x32xf32>
    %244 = arith.addf %242, %243 : vector<16x32xf32>
    %c1_85 = arith.constant 1 : index
    %c0_86 = arith.constant 0 : index
    %c0_87 = arith.constant 0 : index
    %245 = vector.load %arg4[%c1_85, %c0_86, %c0_87] : memref<2x32x64xf32, #tpu.memory_space<vmem>>, vector<1x32x64xf32>
    %246 = vector.shape_cast %245 : vector<1x32x64xf32> to vector<32x64xf32>
    %cst_88 = arith.constant dense<0.000000e+00> : vector<16x64xf32>
    %247 = tpu.matmul %244, %246, %cst_88 {dimension_numbers = #tpu.dot_dimension_numbers<[1], [0], [0], [1], [0, 0, 1, 1], [], []>} : vector<16x32xf32>, vector<32x64xf32>, vector<16x64xf32> -> vector<16x64xf32>
    %248 = vector.broadcast %166 : vector<1x64xf32> to vector<16x64xf32>
    %249 = arith.addf %247, %248 : vector<16x64xf32>
    %cst_89 = arith.constant 5.000000e-01 : f32
    %250 = vector.broadcast %cst_89 : f32 to vector<16x64xf32>
    %251 = arith.mulf %250, %249 : vector<16x64xf32>
    %252 = arith.mulf %249, %249 : vector<16x64xf32>
    %253 = arith.mulf %249, %252 : vector<16x64xf32>
    %cst_90 = arith.constant 4.471500e-02 : f32
    %254 = vector.broadcast %cst_90 : f32 to vector<16x64xf32>
    %255 = arith.mulf %254, %253 : vector<16x64xf32>
    %256 = arith.addf %249, %255 : vector<16x64xf32>
    %cst_91 = arith.constant 0.797884583 : f32
    %257 = vector.broadcast %cst_91 : f32 to vector<16x64xf32>
    %258 = arith.mulf %257, %256 : vector<16x64xf32>
    %259 = math.tanh %258 : vector<16x64xf32>
    %cst_92 = arith.constant 1.000000e+00 : f32
    %260 = vector.broadcast %cst_92 : f32 to vector<16x64xf32>
    %261 = arith.addf %260, %259 : vector<16x64xf32>
    %262 = arith.mulf %251, %261 : vector<16x64xf32>
    %c1_93 = arith.constant 1 : index
    %c0_94 = arith.constant 0 : index
    %c0_95 = arith.constant 0 : index
    %263 = vector.load %arg5[%c1_93, %c0_94, %c0_95] : memref<2x64x32xf32, #tpu.memory_space<vmem>>, vector<1x64x32xf32>
    %264 = vector.shape_cast %263 : vector<1x64x32xf32> to vector<64x32xf32>
    %cst_96 = arith.constant dense<0.000000e+00> : vector<16x32xf32>
    %265 = tpu.matmul %262, %264, %cst_96 {dimension_numbers = #tpu.dot_dimension_numbers<[1], [0], [0], [1], [0, 0, 1, 1], [], []>} : vector<16x64xf32>, vector<64x32xf32>, vector<16x32xf32> -> vector<16x32xf32>
    %266 = vector.extract_strided_slice %162 {offsets = [3, 0], sizes = [1, 32], strides = [1, 1]} : vector<6x32xf32> to vector<1x32xf32>
    %267 = vector.broadcast %266 : vector<1x32xf32> to vector<16x32xf32>
    %268 = arith.addf %265, %267 : vector<16x32xf32>
    %269 = arith.addf %244, %268 : vector<16x32xf32>
    %270 = vector.extract_strided_slice %162 {offsets = [4, 0], sizes = [1, 32], strides = [1, 1]} : vector<6x32xf32> to vector<1x32xf32>
    %271 = vector.extract_strided_slice %162 {offsets = [5, 0], sizes = [1, 32], strides = [1, 1]} : vector<6x32xf32> to vector<1x32xf32>
    %cst_97 = arith.constant dense<0.000000e+00> : vector<16xf32>
    %272 = vector.multi_reduction <add>, %269, %cst_97 [1] : vector<16x32xf32> to vector<16xf32>
    %273 = vector.shape_cast %272 : vector<16xf32> to vector<16x1xf32>
    %cst_98 = arith.constant 3.200000e+01 : f32
    %274 = vector.broadcast %cst_98 : f32 to vector<16x1xf32>
    %275 = arith.divf %273, %274 : vector<16x1xf32>
    %276 = vector.broadcast %275 : vector<16x1xf32> to vector<16x32xf32>
    %277 = arith.subf %269, %276 : vector<16x32xf32>
    %278 = arith.mulf %277, %277 : vector<16x32xf32>
    %cst_99 = arith.constant dense<0.000000e+00> : vector<16xf32>
    %279 = vector.multi_reduction <add>, %278, %cst_99 [1] : vector<16x32xf32> to vector<16xf32>
    %280 = vector.shape_cast %279 : vector<16xf32> to vector<16x1xf32>
    %cst_100 = arith.constant 3.200000e+01 : f32
    %281 = vector.broadcast %cst_100 : f32 to vector<16x1xf32>
    %282 = arith.divf %280, %281 : vector<16x1xf32>
    %283 = vector.broadcast %275 : vector<16x1xf32> to vector<16x32xf32>
    %284 = arith.subf %269, %283 : vector<16x32xf32>
    %cst_101 = arith.constant 9.99999974E-6 : f32
    %285 = vector.broadcast %cst_101 : f32 to vector<16x1xf32>
    %286 = arith.addf %282, %285 : vector<16x1xf32>
    %287 = math.rsqrt %286 : vector<16x1xf32>
    %288 = vector.broadcast %287 : vector<16x1xf32> to vector<16x32xf32>
    %289 = arith.mulf %284, %288 : vector<16x32xf32>
    %290 = vector.broadcast %270 : vector<1x32xf32> to vector<16x32xf32>
    %291 = arith.mulf %289, %290 : vector<16x32xf32>
    %292 = vector.broadcast %271 : vector<1x32xf32> to vector<16x32xf32>
    %293 = arith.addf %291, %292 : vector<16x32xf32>
    %294 = tpu.iota {dimensions = array<i32: 1>} : vector<2x16xi32>
    %295 = tpu.iota {dimensions = array<i32: 0>} : vector<2x16xi32>
    %c8_i32 = arith.constant 8 : i32
    %296 = vector.broadcast %c8_i32 : i32 to vector<2x16xi32>
    %297 = arith.muli %295, %296 : vector<2x16xi32>
    %298 = arith.cmpi eq, %294, %297 : vector<2x16xi32>
    %299 = arith.extui %298 : vector<2x16xi1> to vector<2x16xi32>
    %300 = arith.sitofp %299 : vector<2x16xi32> to vector<2x16xf32>
    %cst_102 = arith.constant dense<0.000000e+00> : vector<2x32xf32>
    %301 = tpu.matmul %300, %293, %cst_102 {dimension_numbers = #tpu.dot_dimension_numbers<[1], [0], [0], [1], [0, 0, 1, 1], [], []>} : vector<2x16xf32>, vector<16x32xf32>, vector<2x32xf32> -> vector<2x32xf32>
    %c0_103 = arith.constant 0 : index
    %c0_104 = arith.constant 0 : index
    %302 = vector.load %arg9[%c0_103, %c0_104] : memref<32x34xf32, #tpu.memory_space<vmem>>, vector<32x34xf32>
    %303 = vector.extract_strided_slice %302 {offsets = [0, 0], sizes = [32, 32], strides = [1, 1]} : vector<32x34xf32> to vector<32x32xf32>
    %cst_105 = arith.constant dense<0.000000e+00> : vector<2x32xf32>
    %304 = tpu.matmul %301, %303, %cst_105 {dimension_numbers = #tpu.dot_dimension_numbers<[1], [0], [0], [1], [0, 0, 1, 1], [], []>} : vector<2x32xf32>, vector<32x32xf32>, vector<2x32xf32> -> vector<2x32xf32>
    %305 = vector.extract_strided_slice %0 {offsets = [2, 0], sizes = [1, 32], strides = [1, 1]} : vector<4x32xf32> to vector<1x32xf32>
    %306 = vector.broadcast %305 : vector<1x32xf32> to vector<2x32xf32>
    %307 = arith.addf %304, %306 : vector<2x32xf32>
    %308 = math.tanh %307 : vector<2x32xf32>
    %309 = vector.extract_strided_slice %302 {offsets = [0, 32], sizes = [32, 2], strides = [1, 1]} : vector<32x34xf32> to vector<32x2xf32>
    %cst_106 = arith.constant dense<0.000000e+00> : vector<2x2xf32>
    %310 = tpu.matmul %308, %309, %cst_106 {dimension_numbers = #tpu.dot_dimension_numbers<[1], [0], [0], [1], [0, 0, 1, 1], [], []>} : vector<2x32xf32>, vector<32x2xf32>, vector<2x2xf32> -> vector<2x2xf32>
    %311 = vector.extract_strided_slice %0 {offsets = [3, 0], sizes = [1, 2], strides = [1, 1]} : vector<4x32xf32> to vector<1x2xf32>
    %312 = vector.broadcast %311 : vector<1x2xf32> to vector<2x2xf32>
    %313 = arith.addf %310, %312 : vector<2x2xf32>
    %c0_107 = arith.constant 0 : index
    %c0_108 = arith.constant 0 : index
    %314 = vector.load %arg10[%c0_107, %c0_108] : memref<2x2xf32, #tpu.memory_space<vmem>>, vector<2x2xf32>
    tpu.vector_store %arg10[%c0_107, %c0_108], %313 {strides = array<i32>} : memref<2x2xf32, #tpu.memory_space<vmem>>, vector<2x2xf32>,
    return
  }
}

</mosaic_0001>

<llo_original>
// kernel: bert_forward.1
$region0: #{bert_forward.1}
  #allocation0 [shape = 'u32[]', space=smem, size = 0x4, offset = 0x4, fixed_abs, tag = 'smem constant byte address 0x4 - core index']
  #allocation1 [shape = 'u32[72,128]{1,0:T(1,128)}', space=vmem, size = 0x9000, scoped, tag = 'internal scratch']
  %s0 = inlined_call_operand.vmem [shape: f32[16,32], index: 0, kind: input, shape index: {}]
  %s1 = inlined_call_operand.vmem [shape: f32[16,16], index: 1, kind: input, shape index: {}]
  %s2 = inlined_call_operand.vmem [shape: f32[2,32,96], index: 2, kind: input, shape index: {}]
  %s3 = inlined_call_operand.vmem [shape: f32[2,32,32], index: 3, kind: input, shape index: {}]
  %s4 = inlined_call_operand.vmem [shape: f32[2,32,64], index: 4, kind: input, shape index: {}]
  %s5 = inlined_call_operand.vmem [shape: f32[2,64,32], index: 5, kind: input, shape index: {}]
  %s6 = inlined_call_operand.vmem [shape: f32[2,2,96], index: 6, kind: input, shape index: {}]
  %s7 = inlined_call_operand.vmem [shape: f32[2,6,32], index: 7, kind: input, shape index: {}]
  %s8 = inlined_call_operand.vmem [shape: f32[4,32], index: 8, kind: input, shape index: {}]
  %s9 = inlined_call_operand.vmem [shape: f32[32,34], index: 9, kind: input, shape index: {}]
  %s10 = inlined_call_operand.hbm [shape: f32[2,2], index: 10, kind: output, shape index: {}]
  %s11 = sld [smem:[#allocation0]]
  $region50: #{bert_forward.1} parent=0
    _
  %s13 = ssub.s32 1, %s11
  %s14 = scalar_select 0, %s13, %s11
  $region1: #{bert_forward.1} parent=0
    #allocation2 [shape = 'u8[1024]{0}', space=vmem, size = 0x400, scoped, tag = 'output window, operand 0, single buffered']
    #allocation3 [shape = 's32[1]{0}', space=sflag, size = 0x4, scoped, tag = 'scoped memory for bert_forward.1']
    %15 = vsyncpa [#allocation3], 0
    // Predicated region
    $region2: #{bert_forward.1} parent=1 // pred_check
      _
    $region3: #{bert_forward.1} parent=1 // pred_check_branch
      %17 = sbr.rel (0) target = $region5
    $region4: #{bert_forward.1} parent=1 // pred_region
      _
    $region5: #{bert_forward.1} parent=1 // pred_fallthru
      _
    // Predicated region
    $region6: #{bert_forward.1} parent=1 // pred_check
      _
    $region7: #{bert_forward.1} parent=1 // pred_check_branch
      %19 = sbr.rel (0) target = $region9
    $region8: #{bert_forward.1} parent=1 // pred_region
      _
    $region9: #{bert_forward.1} parent=1 // pred_fallthru
      _
    // Predicated region
    $region10: #{bert_forward.1} parent=1 // pred_check
      _
    $region11: #{bert_forward.1} parent=1 // pred_check_branch
      %21 = sbr.rel (0) target = $region13
    $region12: #{bert_forward.1} parent=1 // pred_region
      _
    $region13: #{bert_forward.1} parent=1 // pred_fallthru
      _
    // Predicated region
    $region14: #{bert_forward.1} parent=1 // pred_check
      _
    $region15: #{bert_forward.1} parent=1 // pred_check_branch
      %23 = sbr.rel (0) target = $region17
    $region16: #{bert_forward.1} parent=1 // pred_region
      _
    $region17: #{bert_forward.1} parent=1 // pred_fallthru
      _
    // Predicated region
    $region18: #{bert_forward.1} parent=1 // pred_check
      _
    $region19: #{bert_forward.1} parent=1 // pred_check_branch
      %25 = sbr.rel (0) target = $region21
    $region20: #{bert_forward.1} parent=1 // pred_region
      _
    $region21: #{bert_forward.1} parent=1 // pred_fallthru
      _
    // Predicated region
    $region22: #{bert_forward.1} parent=1 // pred_check
      _
    $region23: #{bert_forward.1} parent=1 // pred_check_branch
      %27 = sbr.rel (0) target = $region25
    $region24: #{bert_forward.1} parent=1 // pred_region
      _
    $region25: #{bert_forward.1} parent=1 // pred_fallthru
      _
    // Predicated region
    $region26: #{bert_forward.1} parent=1 // pred_check
      _
    $region27: #{bert_forward.1} parent=1 // pred_check_branch
      %29 = sbr.rel (0) target = $region29
    $region28: #{bert_forward.1} parent=1 // pred_region
      _
    $region29: #{bert_forward.1} parent=1 // pred_fallthru
      _
    // Predicated region
    $region30: #{bert_forward.1} parent=1 // pred_check
      _
    $region31: #{bert_forward.1} parent=1 // pred_check_branch
      %31 = sbr.rel (0) target = $region33
    $region32: #{bert_forward.1} parent=1 // pred_region
      _
    $region33: #{bert_forward.1} parent=1 // pred_fallthru
      _
    // Predicated region
    $region34: #{bert_forward.1} parent=1 // pred_check
      _
    $region35: #{bert_forward.1} parent=1 // pred_check_branch
      %33 = sbr.rel (0) target = $region37
    $region36: #{bert_forward.1} parent=1 // pred_region
      _
    $region37: #{bert_forward.1} parent=1 // pred_fallthru
      _
    // Predicated region
    $region38: #{bert_forward.1} parent=1 // pred_check
      _
    $region39: #{bert_forward.1} parent=1 // pred_check_branch
      %35 = sbr.rel (0) target = $region41
    $region40: #{bert_forward.1} parent=1 // pred_region
      _
    $region41: #{bert_forward.1} parent=1 // pred_fallthru
      _
    %v36 = vld [vmem:[%s8] sm:$0xf]
    %v37 = vld [vmem:[%s0] sm:$0xff]
    %v38 = vld [vmem:[%s0 + $0x8] sm:$0xff]
    %vm39 = vcmask 261120
    %v40 = vsel %vm39, %v37, 0.0
    %41 = vadd.xlane.f32.xlu0 %v40
    %v42 = vpop.xlane.xlu0 %41
    %v43 = vsel %vm39, %v38, 0.0
    %44 = vadd.xlane.f32.xlu0 %v43
    %v45 = vpop.xlane.xlu0 %44
    %v46 = vrcp.pop 32.0
    %v47 = vmul.f32 32.0, %v46
    %v48 = vsub.f32 1.0, %v47
    %v49 = vmul.f32 %v46, %v48
    %v50 = vadd.f32 %v46, %v49
    %vm51 = vweird.f32 %v46
    %v52 = vsel %vm51, %v46, %v50
    %v53 = vmul.f32 %v42, %v52
    %v54 = vmul.f32 %v45, %v52
    %v55 = vsub.f32 %v37, %v53
    %v56 = vsub.f32 %v38, %v54
    %v57 = vmul.f32 %v55, %v55
    %v58 = vmul.f32 %v56, %v56
    %v59 = vsel %vm39, %v57, 0.0
    %60 = vadd.xlane.f32.xlu0 %v59
    %v61 = vpop.xlane.xlu0 %60
    %v62 = vsel %vm39, %v58, 0.0
    %63 = vadd.xlane.f32.xlu0 %v62
    %v64 = vpop.xlane.xlu0 %63
    %v65 = vmul.f32 %v61, %v52
    %v66 = vmul.f32 %v64, %v52
    %v67 = vadd.f32 %v65, 1e-05
    %v68 = vadd.f32 %v66, 1e-05
    %v69 = vrsqrt.pop %v67
    %v70 = vmul.f32 %v69, %v67
    %v71 = vmul.f32 %v70, %v69
    %v72 = vmul.f32 0.5, %v71
    %v73 = vsub.f32 1.5, %v72
    %v74 = vmul.f32 %v69, %v73
    %vm75 = vweird.f32 %v67
    %vm76 = vweird.f32 %v69
    %vm77 = vmor %vm75, %vm76
    %v78 = vsel %vm77, %v69, %v74
    %v79 = vrsqrt.pop %v68
    %v80 = vmul.f32 %v79, %v68
    %v81 = vmul.f32 %v80, %v79
    %v82 = vmul.f32 0.5, %v81
    %v83 = vsub.f32 1.5, %v82
    %v84 = vmul.f32 %v79, %v83
    %vm85 = vweird.f32 %v68
    %vm86 = vweird.f32 %v79
    %vm87 = vmor %vm85, %vm86
    %v88 = vsel %vm87, %v79, %v84
    %v89 = vmul.f32 %v55, %v78
    %v90 = vmul.f32 %v56, %v88
    %v91 = vperm.slane %v36, 0
    %v92 = vmul.f32 %v89, %v91
    %v93 = vmul.f32 %v90, %v91
    %v94 = vperm.slane %v36, 1
    %v95 = vadd.f32 %v92, %v94
    %v96 = vadd.f32 %v93, %v94
    %v97 = vld [vmem:[%s1] sm:$0xff]
    %v98 = vld [vmem:[%s1 + $0x8] sm:$0xff]
    %v99 = vld [vmem:[%s7] sm:$0x3f]
    %v100 = vld [vmem:[%s6] sm:$0x3]
    %v101 = vld [vmem:[%s2] sm:$0xff]
    %v102 = vld [vmem:[%s2 + $0x8] sm:$0xff]
    %v103 = vld [vmem:[%s2 + $0x10] sm:$0xff]
    %v104 = vld [vmem:[%s2 + $0x18] sm:$0xff]
    %v105 = vperm.slane %v100, 0
    %v107 = vsel %vm39, %v95, 0
    %v110 = vsel %vm39, %v96, 0
    %112 = vmatpush.msra.mxu0 0.0
    %113 = vmatpush.msra.mxu0 0.0
    %114 = vmatpush.msra.mxu0 0.0
    %115 = vmatpush.msra.mxu0 0.0
    %116 = vmatpush.msra.mxu0 0.0
    %117 = vmatpush.msra.mxu0 0.0
    %118 = vmatpush.msra.mxu0 0.0
    %119 = vmatpush.msra.mxu0 0.0
    %120 = vmatpush.msra.mxu0 0.0
    %121 = vmatpush.msra.mxu0 0.0
    %122 = vmatpush.msra.mxu0 0.0
    %123 = vmatpush.msra.mxu0 0.0
    %124 = vmatpush.msra.mxu0 %v104
    %125 = vmatpush.msra.mxu0 %v103
    %126 = vmatpush.msra.mxu0 %v102
    %127 = vmatpush.msra.mxu0 %v101
    %128 = vmatmul.f32.gmra.mxu0 %v107
    %v129 = vpop.f32.mrf.mxu0
    %v130 = vadd.f32 %v105, %v129
    %131 = vmatmul.f32.gmra.mxu0 %v110
    %v132 = vpop.f32.mrf.mxu0
    %v133 = vadd.f32 %v105, %v132
    %134 = vdwg.mxu0
    %137 = vrot.lane.b32.xlu0 %v130, 96
    %v138 = vpop.permute.xlu0 %137
    %139 = vrot.lane.b32.xlu0 %v133, 96
    %v140 = vpop.permute.xlu0 %139
    %vm141 = vcmask 64512
    %v142 = vsel %vm141, %v130, 0
    %v144 = vsel %vm141, %v133, 0
    %v146 = vsel %vm141, %v138, 0
    %v148 = vsel %vm141, %v140, 0
    %150 = vmatpush.xpose.msra.mxu0 0.0
    %151 = vmatpush.xpose.msra.mxu0 0.0
    %152 = vmatpush.xpose.msra.mxu0 0.0
    %153 = vmatpush.xpose.msra.mxu0 0.0
    %154 = vmatpush.xpose.msra.mxu0 0.0
    %155 = vmatpush.xpose.msra.mxu0 0.0
    %156 = vmatpush.xpose.msra.mxu0 0.0
    %157 = vmatpush.xpose.msra.mxu0 0.0
    %158 = vmatpush.xpose.msra.mxu0 0.0
    %159 = vmatpush.xpose.msra.mxu0 0.0
    %160 = vmatpush.xpose.msra.mxu0 0.0
    %161 = vmatpush.xpose.msra.mxu0 0.0
    %162 = vmatpush.xpose.msra.mxu0 0.0
    %163 = vmatpush.xpose.msra.mxu0 0.0
    %164 = vmatpush.xpose.msra.mxu0 %v148
    %165 = vmatpush.xpose.msra.mxu0 %v146
    %166 = vmatmul.f32.gmra.mxu0 %v142
    %v167 = vpop.f32.mrf.mxu0
    %v168 = vadd.f32 0.0, %v167
    %169 = vmatmul.f32.gmra.mxu0 %v144
    %v170 = vpop.f32.mrf.mxu0
    %v171 = vadd.f32 0.0, %v170
    %172 = vdwg.mxu0
    %173 = vrot.lane.b32.xlu0 %v130, 120
    %v174 = vpop.permute.xlu0 %173
    %175 = vrot.lane.b32.xlu0 %v133, 120
    %v176 = vpop.permute.xlu0 %175
    %177 = vrot.lane.b32.xlu0 %v130, 88
    %v178 = vpop.permute.xlu0 %177
    %179 = vrot.lane.b32.xlu0 %v133, 88
    %v180 = vpop.permute.xlu0 %179
    %v181 = vsel %vm141, %v174, 0
    %v183 = vsel %vm141, %v176, 0
    %v185 = vsel %vm141, %v178, 0
    %v187 = vsel %vm141, %v180, 0
    %189 = vmatpush.xpose.msra.mxu0 0.0
    %190 = vmatpush.xpose.msra.mxu0 0.0
    %191 = vmatpush.xpose.msra.mxu0 0.0
    %192 = vmatpush.xpose.msra.mxu0 0.0
    %193 = vmatpush.xpose.msra.mxu0 0.0
    %194 = vmatpush.xpose.msra.mxu0 0.0
    %195 = vmatpush.xpose.msra.mxu0 0.0
    %196 = vmatpush.xpose.msra.mxu0 0.0
    %197 = vmatpush.xpose.msra.mxu0 0.0
    %198 = vmatpush.xpose.msra.mxu0 0.0
    %199 = vmatpush.xpose.msra.mxu0 0.0
    %200 = vmatpush.xpose.msra.mxu0 0.0
    %201 = vmatpush.xpose.msra.mxu0 0.0
    %202 = vmatpush.xpose.msra.mxu0 0.0
    %203 = vmatpush.xpose.msra.mxu0 %v187
    %204 = vmatpush.xpose.msra.mxu0 %v185
    %205 = vmatmul.f32.gmra.mxu0 %v181
    %v206 = vpop.f32.mrf.mxu0
    %v207 = vadd.f32 0.0, %v206
    %208 = vmatmul.f32.gmra.mxu0 %v183
    %v209 = vpop.f32.mrf.mxu0
    %v210 = vadd.f32 0.0, %v209
    %211 = vdwg.mxu0
    %212 = vrot.lane.b32.xlu0 %v130, 112
    %v213 = vpop.permute.xlu0 %212
    %214 = vrot.lane.b32.xlu0 %v133, 112
    %v215 = vpop.permute.xlu0 %214
    %216 = vrot.lane.b32.xlu0 %v130, 80
    %v217 = vpop.permute.xlu0 %216
    %218 = vrot.lane.b32.xlu0 %v133, 80
    %v219 = vpop.permute.xlu0 %218
    %v220 = vsel %vm141, %v213, 0
    %v222 = vsel %vm141, %v215, 0
    %v224 = vsel %vm141, %v217, 0
    %v226 = vsel %vm141, %v219, 0
    %228 = vmatpush.xpose.msra.mxu0 0.0
    %229 = vmatpush.xpose.msra.mxu0 0.0
    %230 = vmatpush.xpose.msra.mxu0 0.0
    %231 = vmatpush.xpose.msra.mxu0 0.0
    %232 = vmatpush.xpose.msra.mxu0 0.0
    %233 = vmatpush.xpose.msra.mxu0 0.0
    %234 = vmatpush.xpose.msra.mxu0 0.0
    %235 = vmatpush.xpose.msra.mxu0 0.0
    %236 = vmatpush.xpose.msra.mxu0 0.0
    %237 = vmatpush.xpose.msra.mxu0 0.0
    %238 = vmatpush.xpose.msra.mxu0 0.0
    %239 = vmatpush.xpose.msra.mxu0 0.0
    %240 = vmatpush.xpose.msra.mxu0 0.0
    %241 = vmatpush.xpose.msra.mxu0 0.0
    %242 = vmatpush.xpose.msra.mxu0 %v226
    %243 = vmatpush.xpose.msra.mxu0 %v224
    %244 = vmatmul.f32.gmra.mxu0 %v220
    %v245 = vpop.f32.mrf.mxu0
    %v246 = vadd.f32 0.0, %v245
    %247 = vmatmul.f32.gmra.mxu0 %v222
    %v248 = vpop.f32.mrf.mxu0
    %v249 = vadd.f32 0.0, %v248
    %250 = vdwg.mxu0
    %251 = vrot.lane.b32.xlu0 %v130, 104
    %v252 = vpop.permute.xlu0 %251
    %253 = vrot.lane.b32.xlu0 %v133, 104
    %v254 = vpop.permute.xlu0 %253
    %255 = vrot.lane.b32.xlu0 %v130, 72
    %v256 = vpop.permute.xlu0 %255
    %257 = vrot.lane.b32.xlu0 %v133, 72
    %v258 = vpop.permute.xlu0 %257
    %v259 = vsel %vm141, %v252, 0
    %v261 = vsel %vm141, %v254, 0
    %v263 = vsel %vm141, %v256, 0
    %v265 = vsel %vm141, %v258, 0
    %267 = vmatpush.xpose.msra.mxu0 0.0
    %268 = vmatpush.xpose.msra.mxu0 0.0
    %269 = vmatpush.xpose.msra.mxu0 0.0
    %270 = vmatpush.xpose.msra.mxu0 0.0
    %271 = vmatpush.xpose.msra.mxu0 0.0
    %272 = vmatpush.xpose.msra.mxu0 0.0
    %273 = vmatpush.xpose.msra.mxu0 0.0
    %274 = vmatpush.xpose.msra.mxu0 0.0
    %275 = vmatpush.xpose.msra.mxu0 0.0
    %276 = vmatpush.xpose.msra.mxu0 0.0
    %277 = vmatpush.xpose.msra.mxu0 0.0
    %278 = vmatpush.xpose.msra.mxu0 0.0
    %279 = vmatpush.xpose.msra.mxu0 0.0
    %280 = vmatpush.xpose.msra.mxu0 0.0
    %281 = vmatpush.xpose.msra.mxu0 %v265
    %282 = vmatpush.xpose.msra.mxu0 %v263
    %283 = vmatmul.f32.gmra.mxu0 %v259
    %v284 = vpop.f32.mrf.mxu0
    %v285 = vadd.f32 0.0, %v284
    %286 = vmatmul.f32.gmra.mxu0 %v261
    %v287 = vpop.f32.mrf.mxu0
    %v288 = vadd.f32 0.0, %v287
    %289 = vdwg.mxu0
    %v290 = vmul.f32 %v168, 0.35355338
    %v291 = vmul.f32 %v171, 0.35355338
    %v292 = vmul.f32 %v207, 0.35355338
    %v293 = vmul.f32 %v210, 0.35355338
    %v294 = vmul.f32 %v246, 0.35355338
    %v295 = vmul.f32 %v249, 0.35355338
    %v296 = vmul.f32 %v285, 0.35355338
    %v297 = vmul.f32 %v288, 0.35355338
    %v298 = vadd.f32 %v290, %v97
    %v299 = vadd.f32 %v291, %v98
    %v300 = vadd.f32 %v292, %v97
    %v301 = vadd.f32 %v293, %v98
    %v302 = vadd.f32 %v294, %v97
    %v303 = vadd.f32 %v295, %v98
    %v304 = vadd.f32 %v296, %v97
    %v305 = vadd.f32 %v297, %v98
    %vm306 = vcmask 130048
    %v307 = vsel %vm306, %v298, -inf
    %308 = vmax.xlane.f32.xlu0 %v307
    %v309 = vpop.xlane.xlu0 %308
    %v310 = vsel %vm306, %v299, -inf
    %311 = vmax.xlane.f32.xlu0 %v310
    %v312 = vpop.xlane.xlu0 %311
    %v313 = vsel %vm306, %v300, -inf
    %314 = vmax.xlane.f32.xlu0 %v313
    %v315 = vpop.xlane.xlu0 %314
    %v316 = vsel %vm306, %v301, -inf
    %317 = vmax.xlane.f32.xlu0 %v316
    %v318 = vpop.xlane.xlu0 %317
    %v319 = vsel %vm306, %v302, -inf
    %320 = vmax.xlane.f32.xlu0 %v319
    %v321 = vpop.xlane.xlu0 %320
    %v322 = vsel %vm306, %v303, -inf
    %323 = vmax.xlane.f32.xlu0 %v322
    %v324 = vpop.xlane.xlu0 %323
    %v325 = vsel %vm306, %v304, -inf
    %326 = vmax.xlane.f32.xlu0 %v325
    %v327 = vpop.xlane.xlu0 %326
    %v328 = vsel %vm306, %v305, -inf
    %329 = vmax.xlane.f32.xlu0 %v328
    %v330 = vpop.xlane.xlu0 %329
    %v331 = vsub.f32 %v298, %v309
    %v332 = vsub.f32 %v299, %v312
    %v333 = vsub.f32 %v300, %v315
    %v334 = vsub.f32 %v301, %v318
    %v335 = vsub.f32 %v302, %v321
    %v336 = vsub.f32 %v303, %v324
    %v337 = vsub.f32 %v304, %v327
    %v338 = vsub.f32 %v305, %v330
    %v339 = vmul.f32 %v331, 1.442695
    %v340 = vpow.pop %v339
    %v341 = vmul.f32 %v332, 1.442695
    %v342 = vpow.pop %v341
    %v343 = vmul.f32 %v333, 1.442695
    %v344 = vpow.pop %v343
    %v345 = vmul.f32 %v334, 1.442695
    %v346 = vpow.pop %v345
    %v347 = vmul.f32 %v335, 1.442695
    %v348 = vpow.pop %v347
    %v349 = vmul.f32 %v336, 1.442695
    %v350 = vpow.pop %v349
    %v351 = vmul.f32 %v337, 1.442695
    %v352 = vpow.pop %v351
    %v353 = vmul.f32 %v338, 1.442695
    %v354 = vpow.pop %v353
    %v355 = vsel %vm306, %v340, 0.0
    %356 = vadd.xlane.f32.xlu0 %v355
    %v357 = vpop.xlane.xlu0 %356
    %v358 = vsel %vm306, %v342, 0.0
    %359 = vadd.xlane.f32.xlu0 %v358
    %v360 = vpop.xlane.xlu0 %359
    %v361 = vsel %vm306, %v344, 0.0
    %362 = vadd.xlane.f32.xlu0 %v361
    %v363 = vpop.xlane.xlu0 %362
    %v364 = vsel %vm306, %v346, 0.0
    %365 = vadd.xlane.f32.xlu0 %v364
    %v366 = vpop.xlane.xlu0 %365
    %v367 = vsel %vm306, %v348, 0.0
    %368 = vadd.xlane.f32.xlu0 %v367
    %v369 = vpop.xlane.xlu0 %368
    %v370 = vsel %vm306, %v350, 0.0
    %371 = vadd.xlane.f32.xlu0 %v370
    %v372 = vpop.xlane.xlu0 %371
    %v373 = vsel %vm306, %v352, 0.0
    %374 = vadd.xlane.f32.xlu0 %v373
    %v375 = vpop.xlane.xlu0 %374
    %v376 = vsel %vm306, %v354, 0.0
    %377 = vadd.xlane.f32.xlu0 %v376
    %v378 = vpop.xlane.xlu0 %377
    %v379 = vrcp.pop %v357
    %v380 = vmul.f32 %v357, %v379
    %v381 = vsub.f32 1.0, %v380
    %v382 = vmul.f32 %v379, %v381
    %v383 = vadd.f32 %v379, %v382
    %vm384 = vweird.f32 %v357
    %vm385 = vweird.f32 %v379
    %vm386 = vmor %vm384, %vm385
    %v387 = vsel %vm386, %v379, %v383
    %v388 = vand.u32 2147483647, %v357
    %vm389 = vcmp.eq.f32.partialorder %v388, 8.507059e+37
    %v390 = vand.u32 %v357, 2147483648
    %v391 = vor.u32 1.1754944e-38, %v390
    %v392 = vsel %vm389, %v391, %v387
    %v393 = vrcp.pop %v360
    %v394 = vmul.f32 %v360, %v393
    %v395 = vsub.f32 1.0, %v394
    %v396 = vmul.f32 %v393, %v395
    %v397 = vadd.f32 %v393, %v396
    %vm398 = vweird.f32 %v360
    %vm399 = vweird.f32 %v393
    %vm400 = vmor %vm398, %vm399
    %v401 = vsel %vm400, %v393, %v397
    %v402 = vand.u32 2147483647, %v360
    %vm403 = vcmp.eq.f32.partialorder %v402, 8.507059e+37
    %v404 = vand.u32 %v360, 2147483648
    %v405 = vor.u32 1.1754944e-38, %v404
    %v406 = vsel %vm403, %v405, %v401
    %v407 = vrcp.pop %v363
    %v408 = vmul.f32 %v363, %v407
    %v409 = vsub.f32 1.0, %v408
    %v410 = vmul.f32 %v407, %v409
    %v411 = vadd.f32 %v407, %v410
    %vm412 = vweird.f32 %v363
    %vm413 = vweird.f32 %v407
    %vm414 = vmor %vm412, %vm413
    %v415 = vsel %vm414, %v407, %v411
    %v416 = vand.u32 2147483647, %v363
    %vm417 = vcmp.eq.f32.partialorder %v416, 8.507059e+37
    %v418 = vand.u32 %v363, 2147483648
    %v419 = vor.u32 1.1754944e-38, %v418
    %v420 = vsel %vm417, %v419, %v415
    %v421 = vrcp.pop %v366
    %v422 = vmul.f32 %v366, %v421
    %v423 = vsub.f32 1.0, %v422
    %v424 = vmul.f32 %v421, %v423
    %v425 = vadd.f32 %v421, %v424
    %vm426 = vweird.f32 %v366
    %vm427 = vweird.f32 %v421
    %vm428 = vmor %vm426, %vm427
    %v429 = vsel %vm428, %v421, %v425
    %v430 = vand.u32 2147483647, %v366
    %vm431 = vcmp.eq.f32.partialorder %v430, 8.507059e+37
    %v432 = vand.u32 %v366, 2147483648
    %v433 = vor.u32 1.1754944e-38, %v432
    %v434 = vsel %vm431, %v433, %v429
    %v435 = vrcp.pop %v369
    %v436 = vmul.f32 %v369, %v435
    %v437 = vsub.f32 1.0, %v436
    %v438 = vmul.f32 %v435, %v437
    %v439 = vadd.f32 %v435, %v438
    %vm440 = vweird.f32 %v369
    %vm441 = vweird.f32 %v435
    %vm442 = vmor %vm440, %vm441
    %v443 = vsel %vm442, %v435, %v439
    %v444 = vand.u32 2147483647, %v369
    %vm445 = vcmp.eq.f32.partialorder %v444, 8.507059e+37
    %v446 = vand.u32 %v369, 2147483648
    %v447 = vor.u32 1.1754944e-38, %v446
    %v448 = vsel %vm445, %v447, %v443
    %v449 = vrcp.pop %v372
    %v450 = vmul.f32 %v372, %v449
    %v451 = vsub.f32 1.0, %v450
    %v452 = vmul.f32 %v449, %v451
    %v453 = vadd.f32 %v449, %v452
    %vm454 = vweird.f32 %v372
    %vm455 = vweird.f32 %v449
    %vm456 = vmor %vm454, %vm455
    %v457 = vsel %vm456, %v449, %v453
    %v458 = vand.u32 2147483647, %v372
    %vm459 = vcmp.eq.f32.partialorder %v458, 8.507059e+37
    %v460 = vand.u32 %v372, 2147483648
    %v461 = vor.u32 1.1754944e-38, %v460
    %v462 = vsel %vm459, %v461, %v457
    %v463 = vrcp.pop %v375
    %v464 = vmul.f32 %v375, %v463
    %v465 = vsub.f32 1.0, %v464
    %v466 = vmul.f32 %v463, %v465
    %v467 = vadd.f32 %v463, %v466
    %vm468 = vweird.f32 %v375
    %vm469 = vweird.f32 %v463
    %vm470 = vmor %vm468, %vm469
    %v471 = vsel %vm470, %v463, %v467
    %v472 = vand.u32 2147483647, %v375
    %vm473 = vcmp.eq.f32.partialorder %v472, 8.507059e+37
    %v474 = vand.u32 %v375, 2147483648
    %v475 = vor.u32 1.1754944e-38, %v474
    %v476 = vsel %vm473, %v475, %v471
    %v477 = vrcp.pop %v378
    %v478 = vmul.f32 %v378, %v477
    %v479 = vsub.f32 1.0, %v478
    %v480 = vmul.f32 %v477, %v479
    %v481 = vadd.f32 %v477, %v480
    %vm482 = vweird.f32 %v378
    %vm483 = vweird.f32 %v477
    %vm484 = vmor %vm482, %vm483
    %v485 = vsel %vm484, %v477, %v481
    %v486 = vand.u32 2147483647, %v378
    %vm487 = vcmp.eq.f32.partialorder %v486, 8.507059e+37
    %v488 = vand.u32 %v378, 2147483648
    %v489 = vor.u32 1.1754944e-38, %v488
    %v490 = vsel %vm487, %v489, %v485
    %v491 = vmul.f32 %v340, %v392
    %v492 = vmul.f32 %v342, %v406
    %v493 = vmul.f32 %v344, %v420
    %v494 = vmul.f32 %v346, %v434
    %v495 = vmul.f32 %v348, %v448
    %v496 = vmul.f32 %v350, %v462
    %v497 = vmul.f32 %v352, %v476
    %v498 = vmul.f32 %v354, %v490
    %499 = vrot.lane.b32.xlu0 %v130, 64
    %v500 = vpop.permute.xlu0 %499
    %501 = vrot.lane.b32.xlu0 %v133, 64
    %v502 = vpop.permute.xlu0 %501
    %v506 = vsel %vm306, %v491, 0
    %v509 = vsel %vm306, %v492, 0
    %511 = vmatpush.msra.mxu0 0.0
    %512 = vmatpush.msra.mxu0 0.0
    %513 = vmatpush.msra.mxu0 0.0
    %514 = vmatpush.msra.mxu0 0.0
    %515 = vmatpush.msra.mxu0 0.0
    %516 = vmatpush.msra.mxu0 0.0
    %517 = vmatpush.msra.mxu0 0.0
    %518 = vmatpush.msra.mxu0 0.0
    %519 = vmatpush.msra.mxu0 0.0
    %520 = vmatpush.msra.mxu0 0.0
    %521 = vmatpush.msra.mxu0 0.0
    %522 = vmatpush.msra.mxu0 0.0
    %523 = vmatpush.msra.mxu0 0.0
    %524 = vmatpush.msra.mxu0 0.0
    %525 = vmatpush.msra.mxu0 %v502
    %526 = vmatpush.msra.mxu0 %v500
    %527 = vmatmul.f32.gmra.mxu0 %v506
    %v528 = vpop.f32.mrf.mxu0
    %v529 = vadd.f32 0.0, %v528
    %530 = vmatmul.f32.gmra.mxu0 %v509
    %v531 = vpop.f32.mrf.mxu0
    %v532 = vadd.f32 0.0, %v531
    %533 = vdwg.mxu0
    %534 = vrot.lane.b32.xlu0 %v130, 56
    %v535 = vpop.permute.xlu0 %534
    %536 = vrot.lane.b32.xlu0 %v133, 56
    %v537 = vpop.permute.xlu0 %536
    %v541 = vsel %vm306, %v493, 0
    %v544 = vsel %vm306, %v494, 0
    %546 = vmatpush.msra.mxu0 0.0
    %547 = vmatpush.msra.mxu0 0.0
    %548 = vmatpush.msra.mxu0 0.0
    %549 = vmatpush.msra.mxu0 0.0
    %550 = vmatpush.msra.mxu0 0.0
    %551 = vmatpush.msra.mxu0 0.0
    %552 = vmatpush.msra.mxu0 0.0
    %553 = vmatpush.msra.mxu0 0.0
    %554 = vmatpush.msra.mxu0 0.0
    %555 = vmatpush.msra.mxu0 0.0
    %556 = vmatpush.msra.mxu0 0.0
    %557 = vmatpush.msra.mxu0 0.0
    %558 = vmatpush.msra.mxu0 0.0
    %559 = vmatpush.msra.mxu0 0.0
    %560 = vmatpush.msra.mxu0 %v537
    %561 = vmatpush.msra.mxu0 %v535
    %562 = vmatmul.f32.gmra.mxu0 %v541
    %v563 = vpop.f32.mrf.mxu0
    %v564 = vadd.f32 0.0, %v563
    %565 = vmatmul.f32.gmra.mxu0 %v544
    %v566 = vpop.f32.mrf.mxu0
    %v567 = vadd.f32 0.0, %v566
    %568 = vdwg.mxu0
    %569 = vrot.lane.b32.xlu0 %v130, 48
    %v570 = vpop.permute.xlu0 %569
    %571 = vrot.lane.b32.xlu0 %v133, 48
    %v572 = vpop.permute.xlu0 %571
    %v576 = vsel %vm306, %v495, 0
    %v579 = vsel %vm306, %v496, 0
    %581 = vmatpush.msra.mxu0 0.0
    %582 = vmatpush.msra.mxu0 0.0
    %583 = vmatpush.msra.mxu0 0.0
    %584 = vmatpush.msra.mxu0 0.0
    %585 = vmatpush.msra.mxu0 0.0
    %586 = vmatpush.msra.mxu0 0.0
    %587 = vmatpush.msra.mxu0 0.0
    %588 = vmatpush.msra.mxu0 0.0
    %589 = vmatpush.msra.mxu0 0.0
    %590 = vmatpush.msra.mxu0 0.0
    %591 = vmatpush.msra.mxu0 0.0
    %592 = vmatpush.msra.mxu0 0.0
    %593 = vmatpush.msra.mxu0 0.0
    %594 = vmatpush.msra.mxu0 0.0
    %595 = vmatpush.msra.mxu0 %v572
    %596 = vmatpush.msra.mxu0 %v570
    %597 = vmatmul.f32.gmra.mxu0 %v576
    %v598 = vpop.f32.mrf.mxu0
    %v599 = vadd.f32 0.0, %v598
    %600 = vmatmul.f32.gmra.mxu0 %v579
    %v601 = vpop.f32.mrf.mxu0
    %v602 = vadd.f32 0.0, %v601
    %603 = vdwg.mxu0
    %604 = vrot.lane.b32.xlu0 %v130, 40
    %v605 = vpop.permute.xlu0 %604
    %606 = vrot.lane.b32.xlu0 %v133, 40
    %v607 = vpop.permute.xlu0 %606
    %v611 = vsel %vm306, %v497, 0
    %v614 = vsel %vm306, %v498, 0
    %616 = vmatpush.msra.mxu0 0.0
    %617 = vmatpush.msra.mxu0 0.0
    %618 = vmatpush.msra.mxu0 0.0
    %619 = vmatpush.msra.mxu0 0.0
    %620 = vmatpush.msra.mxu0 0.0
    %621 = vmatpush.msra.mxu0 0.0
    %622 = vmatpush.msra.mxu0 0.0
    %623 = vmatpush.msra.mxu0 0.0
    %624 = vmatpush.msra.mxu0 0.0
    %625 = vmatpush.msra.mxu0 0.0
    %626 = vmatpush.msra.mxu0 0.0
    %627 = vmatpush.msra.mxu0 0.0
    %628 = vmatpush.msra.mxu0 0.0
    %629 = vmatpush.msra.mxu0 0.0
    %630 = vmatpush.msra.mxu0 %v607
    %631 = vmatpush.msra.mxu0 %v605
    %632 = vmatmul.f32.gmra.mxu0 %v611
    %v633 = vpop.f32.mrf.mxu0
    %v634 = vadd.f32 0.0, %v633
    %635 = vmatmul.f32.gmra.mxu0 %v614
    %v636 = vpop.f32.mrf.mxu0
    %v637 = vadd.f32 0.0, %v636
    %638 = vdwg.mxu0
    %641 = vrot.lane.b32.xlu0 %v564, 8
    %v642 = vpop.permute.xlu0 %641
    %643 = vrot.lane.b32.xlu0 %v567, 8
    %v644 = vpop.permute.xlu0 %643
    %649 = vrot.lane.b32.xlu0 %v599, 16
    %v650 = vpop.permute.xlu0 %649
    %651 = vrot.lane.b32.xlu0 %v602, 16
    %v652 = vpop.permute.xlu0 %651
    %657 = vrot.lane.b32.xlu0 %v634, 24
    %v658 = vpop.permute.xlu0 %657
    %659 = vrot.lane.b32.xlu0 %v637, 24
    %v660 = vpop.permute.xlu0 %659
    %v663 = vsel %vm141, %v529, %v642
    %v664 = vsel %vm141, %v532, %v644
    %v665 = vsel %vm306, %v663, %v650
    %v666 = vsel %vm306, %v664, %v652
    %vm667 = vcmask 195584
    %v668 = vsel %vm667, %v665, %v658
    %v669 = vsel %vm667, %v666, %v660
    %v670 = vld [vmem:[%s3] sm:$0xff]
    %v671 = vld [vmem:[%s3 + $0x8] sm:$0xff]
    %v672 = vld [vmem:[%s3 + $0x10] sm:$0xff]
    %v673 = vld [vmem:[%s3 + $0x18] sm:$0xff]
    %v674 = vperm.slane %v99, 0
    %v676 = vsel %vm39, %v668, 0
    %v679 = vsel %vm39, %v669, 0
    %681 = vmatpush.msra.mxu0 0.0
    %682 = vmatpush.msra.mxu0 0.0
    %683 = vmatpush.msra.mxu0 0.0
    %684 = vmatpush.msra.mxu0 0.0
    %685 = vmatpush.msra.mxu0 0.0
    %686 = vmatpush.msra.mxu0 0.0
    %687 = vmatpush.msra.mxu0 0.0
    %688 = vmatpush.msra.mxu0 0.0
    %689 = vmatpush.msra.mxu0 0.0
    %690 = vmatpush.msra.mxu0 0.0
    %691 = vmatpush.msra.mxu0 0.0
    %692 = vmatpush.msra.mxu0 0.0
    %693 = vmatpush.msra.mxu0 %v673
    %694 = vmatpush.msra.mxu0 %v672
    %695 = vmatpush.msra.mxu0 %v671
    %696 = vmatpush.msra.mxu0 %v670
    %697 = vmatmul.f32.gmra.mxu0 %v676
    %v698 = vpop.f32.mrf.mxu0
    %v699 = vadd.f32 %v674, %v698
    %700 = vmatmul.f32.gmra.mxu0 %v679
    %v701 = vpop.f32.mrf.mxu0
    %v702 = vadd.f32 %v674, %v701
    %703 = vdwg.mxu0
    %v704 = vadd.f32 %v95, %v699
    %v705 = vadd.f32 %v96, %v702
    %v706 = vsel %vm39, %v704, 0.0
    %707 = vadd.xlane.f32.xlu0 %v706
    %v708 = vpop.xlane.xlu0 %707
    %v709 = vsel %vm39, %v705, 0.0
    %710 = vadd.xlane.f32.xlu0 %v709
    %v711 = vpop.xlane.xlu0 %710
    %v712 = vmul.f32 %v708, %v52
    %v713 = vmul.f32 %v711, %v52
    %v714 = vsub.f32 %v704, %v712
    %v715 = vsub.f32 %v705, %v713
    %v716 = vmul.f32 %v714, %v714
    %v717 = vmul.f32 %v715, %v715
    %v718 = vsel %vm39, %v716, 0.0
    %719 = vadd.xlane.f32.xlu0 %v718
    %v720 = vpop.xlane.xlu0 %719
    %v721 = vsel %vm39, %v717, 0.0
    %722 = vadd.xlane.f32.xlu0 %v721
    %v723 = vpop.xlane.xlu0 %722
    %v724 = vmul.f32 %v720, %v52
    %v725 = vmul.f32 %v723, %v52
    %v726 = vadd.f32 %v724, 1e-05
    %v727 = vadd.f32 %v725, 1e-05
    %v728 = vrsqrt.pop %v726
    %v729 = vmul.f32 %v728, %v726
    %v730 = vmul.f32 %v729, %v728
    %v731 = vmul.f32 0.5, %v730
    %v732 = vsub.f32 1.5, %v731
    %v733 = vmul.f32 %v728, %v732
    %vm734 = vweird.f32 %v726
    %vm735 = vweird.f32 %v728
    %vm736 = vmor %vm734, %vm735
    %v737 = vsel %vm736, %v728, %v733
    %v738 = vrsqrt.pop %v727
    %v739 = vmul.f32 %v738, %v727
    %v740 = vmul.f32 %v739, %v738
    %v741 = vmul.f32 0.5, %v740
    %v742 = vsub.f32 1.5, %v741
    %v743 = vmul.f32 %v738, %v742
    %vm744 = vweird.f32 %v727
    %vm745 = vweird.f32 %v738
    %vm746 = vmor %vm744, %vm745
    %v747 = vsel %vm746, %v738, %v743
    %v748 = vmul.f32 %v714, %v737
    %v749 = vmul.f32 %v715, %v747
    %v750 = vperm.slane %v99, 1
    %v751 = vmul.f32 %v748, %v750
    %v752 = vmul.f32 %v749, %v750
    %v753 = vperm.slane %v99, 2
    %v754 = vadd.f32 %v751, %v753
    %v755 = vadd.f32 %v752, %v753
    %v756 = vld [vmem:[%s4] sm:$0xff]
    %v757 = vld [vmem:[%s4 + $0x8] sm:$0xff]
    %v758 = vld [vmem:[%s4 + $0x10] sm:$0xff]
    %v759 = vld [vmem:[%s4 + $0x18] sm:$0xff]
    %v760 = vperm.slane %v100, 1
    %v762 = vsel %vm39, %v754, 0
    %v765 = vsel %vm39, %v755, 0
    %767 = vmatpush.msra.mxu0 0.0
    %768 = vmatpush.msra.mxu0 0.0
    %769 = vmatpush.msra.mxu0 0.0
    %770 = vmatpush.msra.mxu0 0.0
    %771 = vmatpush.msra.mxu0 0.0
    %772 = vmatpush.msra.mxu0 0.0
    %773 = vmatpush.msra.mxu0 0.0
    %774 = vmatpush.msra.mxu0 0.0
    %775 = vmatpush.msra.mxu0 0.0
    %776 = vmatpush.msra.mxu0 0.0
    %777 = vmatpush.msra.mxu0 0.0
    %778 = vmatpush.msra.mxu0 0.0
    %779 = vmatpush.msra.mxu0 %v759
    %780 = vmatpush.msra.mxu0 %v758
    %781 = vmatpush.msra.mxu0 %v757
    %782 = vmatpush.msra.mxu0 %v756
    %783 = vmatmul.f32.gmra.mxu0 %v762
    %v784 = vpop.f32.mrf.mxu0
    %v785 = vadd.f32 %v760, %v784
    %786 = vmatmul.f32.gmra.mxu0 %v765
    %v787 = vpop.f32.mrf.mxu0
    %v788 = vadd.f32 %v760, %v787
    %789 = vdwg.mxu0
    %v790 = vmul.f32 %v785, 0.5
    %v791 = vmul.f32 %v788, 0.5
    %v792 = vmul.f32 %v785, %v785
    %v793 = vmul.f32 %v788, %v788
    %v794 = vmul.f32 %v785, %v792
    %v795 = vmul.f32 %v788, %v793
    %v796 = vmul.f32 %v794, 0.044715
    %v797 = vmul.f32 %v795, 0.044715
    %v798 = vadd.f32 %v785, %v796
    %v799 = vadd.f32 %v788, %v797
    %v800 = vmul.f32 %v798, 0.7978846
    %v801 = vmul.f32 %v799, 0.7978846
    %v802 = vtanh.pop %v800
    %v803 = vtanh.pop %v801
    %v804 = vadd.f32 %v802, 1.0
    %v805 = vadd.f32 %v803, 1.0
    %v806 = vmul.f32 %v790, %v804
    %v807 = vmul.f32 %v791, %v805
    %v808 = vld [vmem:[%s5] sm:$0xff]
    %v809 = vld [vmem:[%s5 + $0x8] sm:$0xff]
    %v810 = vld [vmem:[%s5 + $0x10] sm:$0xff]
    %v811 = vld [vmem:[%s5 + $0x18] sm:$0xff]
    %v812 = vld [vmem:[%s5 + $0x20] sm:$0xff]
    %v813 = vld [vmem:[%s5 + $0x28] sm:$0xff]
    %v814 = vld [vmem:[%s5 + $0x30] sm:$0xff]
    %v815 = vld [vmem:[%s5 + $0x38] sm:$0xff]
    %v816 = vperm.slane %v99, 3
    %vm817 = vcmask 523264
    %v819 = vsel %vm817, %v806, 0
    %v822 = vsel %vm817, %v807, 0
    %824 = vmatpush.msra.mxu0 0.0
    %825 = vmatpush.msra.mxu0 0.0
    %826 = vmatpush.msra.mxu0 0.0
    %827 = vmatpush.msra.mxu0 0.0
    %828 = vmatpush.msra.mxu0 0.0
    %829 = vmatpush.msra.mxu0 0.0
    %830 = vmatpush.msra.mxu0 0.0
    %831 = vmatpush.msra.mxu0 0.0
    %832 = vmatpush.msra.mxu0 %v815
    %833 = vmatpush.msra.mxu0 %v814
    %834 = vmatpush.msra.mxu0 %v813
    %835 = vmatpush.msra.mxu0 %v812
    %836 = vmatpush.msra.mxu0 %v811
    %837 = vmatpush.msra.mxu0 %v810
    %838 = vmatpush.msra.mxu0 %v809
    %839 = vmatpush.msra.mxu0 %v808
    %840 = vmatmul.f32.gmra.mxu0 %v819
    %v841 = vpop.f32.mrf.mxu0
    %v842 = vadd.f32 %v816, %v841
    %843 = vmatmul.f32.gmra.mxu0 %v822
    %v844 = vpop.f32.mrf.mxu0
    %v845 = vadd.f32 %v816, %v844
    %846 = vdwg.mxu0
    %v847 = vadd.f32 %v754, %v842
    %v848 = vadd.f32 %v755, %v845
    %v849 = vsel %vm39, %v847, 0.0
    %850 = vadd.xlane.f32.xlu0 %v849
    %v851 = vpop.xlane.xlu0 %850
    %v852 = vsel %vm39, %v848, 0.0
    %853 = vadd.xlane.f32.xlu0 %v852
    %v854 = vpop.xlane.xlu0 %853
    %v855 = vmul.f32 %v851, %v52
    %v856 = vmul.f32 %v854, %v52
    %v857 = vsub.f32 %v847, %v855
    %v858 = vsub.f32 %v848, %v856
    %v859 = vmul.f32 %v857, %v857
    %v860 = vmul.f32 %v858, %v858
    %v861 = vsel %vm39, %v859, 0.0
    %862 = vadd.xlane.f32.xlu0 %v861
    %v863 = vpop.xlane.xlu0 %862
    %v864 = vsel %vm39, %v860, 0.0
    %865 = vadd.xlane.f32.xlu0 %v864
    %v866 = vpop.xlane.xlu0 %865
    %v867 = vmul.f32 %v863, %v52
    %v868 = vmul.f32 %v866, %v52
    %v869 = vadd.f32 %v867, 1e-05
    %v870 = vadd.f32 %v868, 1e-05
    %v871 = vrsqrt.pop %v869
    %v872 = vmul.f32 %v871, %v869
    %v873 = vmul.f32 %v872, %v871
    %v874 = vmul.f32 0.5, %v873
    %v875 = vsub.f32 1.5, %v874
    %v876 = vmul.f32 %v871, %v875
    %vm877 = vweird.f32 %v869
    %vm878 = vweird.f32 %v871
    %vm879 = vmor %vm877, %vm878
    %v880 = vsel %vm879, %v871, %v876
    %v881 = vrsqrt.pop %v870
    %v882 = vmul.f32 %v881, %v870
    %v883 = vmul.f32 %v882, %v881
    %v884 = vmul.f32 0.5, %v883
    %v885 = vsub.f32 1.5, %v884
    %v886 = vmul.f32 %v881, %v885
    %vm887 = vweird.f32 %v870
    %vm888 = vweird.f32 %v881
    %vm889 = vmor %vm887, %vm888
    %v890 = vsel %vm889, %v881, %v886
    %v891 = vmul.f32 %v857, %v880
    %v892 = vmul.f32 %v858, %v890
    %v893 = vperm.slane %v99, 4
    %v894 = vmul.f32 %v891, %v893
    %v895 = vmul.f32 %v892, %v893
    %v896 = vperm.slane %v99, 5
    %v897 = vadd.f32 %v894, %v896
    %v898 = vadd.f32 %v895, %v896
    %s899 = scalar_lea.vmem %s7, 8
    %v900 = vld [vmem:[%s899] sm:$0x3f]
    %s901 = scalar_lea.vmem %s6, 2
    %v902 = vld [vmem:[%s901] sm:$0x3]
    %s903 = scalar_lea.vmem %s2, 32
    %v904 = vld [vmem:[%s903] sm:$0xff]
    %v905 = vld [vmem:[%s903 + $0x8] sm:$0xff]
    %v906 = vld [vmem:[%s903 + $0x10] sm:$0xff]
    %v907 = vld [vmem:[%s903 + $0x18] sm:$0xff]
    %v908 = vperm.slane %v902, 0
    %v910 = vsel %vm39, %v897, 0
    %v913 = vsel %vm39, %v898, 0
    %915 = vmatpush.msra.mxu0 0.0
    %916 = vmatpush.msra.mxu0 0.0
    %917 = vmatpush.msra.mxu0 0.0
    %918 = vmatpush.msra.mxu0 0.0
    %919 = vmatpush.msra.mxu0 0.0
    %920 = vmatpush.msra.mxu0 0.0
    %921 = vmatpush.msra.mxu0 0.0
    %922 = vmatpush.msra.mxu0 0.0
    %923 = vmatpush.msra.mxu0 0.0
    %924 = vmatpush.msra.mxu0 0.0
    %925 = vmatpush.msra.mxu0 0.0
    %926 = vmatpush.msra.mxu0 0.0
    %927 = vmatpush.msra.mxu0 %v907
    %928 = vmatpush.msra.mxu0 %v906
    %929 = vmatpush.msra.mxu0 %v905
    %930 = vmatpush.msra.mxu0 %v904
    %931 = vmatmul.f32.gmra.mxu0 %v910
    %v932 = vpop.f32.mrf.mxu0
    %v933 = vadd.f32 %v908, %v932
    %934 = vmatmul.f32.gmra.mxu0 %v913
    %v935 = vpop.f32.mrf.mxu0
    %v936 = vadd.f32 %v908, %v935
    %937 = vdwg.mxu0
    %940 = vrot.lane.b32.xlu0 %v933, 96
    %v941 = vpop.permute.xlu0 %940
    %942 = vrot.lane.b32.xlu0 %v936, 96
    %v943 = vpop.permute.xlu0 %942
    %v944 = vsel %vm141, %v933, 0
    %v946 = vsel %vm141, %v936, 0
    %v948 = vsel %vm141, %v941, 0
    %v950 = vsel %vm141, %v943, 0
    %952 = vmatpush.xpose.msra.mxu0 0.0
    %953 = vmatpush.xpose.msra.mxu0 0.0
    %954 = vmatpush.xpose.msra.mxu0 0.0
    %955 = vmatpush.xpose.msra.mxu0 0.0
    %956 = vmatpush.xpose.msra.mxu0 0.0
    %957 = vmatpush.xpose.msra.mxu0 0.0
    %958 = vmatpush.xpose.msra.mxu0 0.0
    %959 = vmatpush.xpose.msra.mxu0 0.0
    %960 = vmatpush.xpose.msra.mxu0 0.0
    %961 = vmatpush.xpose.msra.mxu0 0.0
    %962 = vmatpush.xpose.msra.mxu0 0.0
    %963 = vmatpush.xpose.msra.mxu0 0.0
    %964 = vmatpush.xpose.msra.mxu0 0.0
    %965 = vmatpush.xpose.msra.mxu0 0.0
    %966 = vmatpush.xpose.msra.mxu0 %v950
    %967 = vmatpush.xpose.msra.mxu0 %v948
    %968 = vmatmul.f32.gmra.mxu0 %v944
    %v969 = vpop.f32.mrf.mxu0
    %v970 = vadd.f32 0.0, %v969
    %971 = vmatmul.f32.gmra.mxu0 %v946
    %v972 = vpop.f32.mrf.mxu0
    %v973 = vadd.f32 0.0, %v972
    %974 = vdwg.mxu0
    %975 = vrot.lane.b32.xlu0 %v933, 120
    %v976 = vpop.permute.xlu0 %975
    %977 = vrot.lane.b32.xlu0 %v936, 120
    %v978 = vpop.permute.xlu0 %977
    %979 = vrot.lane.b32.xlu0 %v933, 88
    %v980 = vpop.permute.xlu0 %979
    %981 = vrot.lane.b32.xlu0 %v936, 88
    %v982 = vpop.permute.xlu0 %981
    %v983 = vsel %vm141, %v976, 0
    %v985 = vsel %vm141, %v978, 0
    %v987 = vsel %vm141, %v980, 0
    %v989 = vsel %vm141, %v982, 0
    %991 = vmatpush.xpose.msra.mxu0 0.0
    %992 = vmatpush.xpose.msra.mxu0 0.0
    %993 = vmatpush.xpose.msra.mxu0 0.0
    %994 = vmatpush.xpose.msra.mxu0 0.0
    %995 = vmatpush.xpose.msra.mxu0 0.0
    %996 = vmatpush.xpose.msra.mxu0 0.0
    %997 = vmatpush.xpose.msra.mxu0 0.0
    %998 = vmatpush.xpose.msra.mxu0 0.0
    %999 = vmatpush.xpose.msra.mxu0 0.0
    %1000 = vmatpush.xpose.msra.mxu0 0.0
    %1001 = vmatpush.xpose.msra.mxu0 0.0
    %1002 = vmatpush.xpose.msra.mxu0 0.0
    %1003 = vmatpush.xpose.msra.mxu0 0.0
    %1004 = vmatpush.xpose.msra.mxu0 0.0
    %1005 = vmatpush.xpose.msra.mxu0 %v989
    %1006 = vmatpush.xpose.msra.mxu0 %v987
    %1007 = vmatmul.f32.gmra.mxu0 %v983
    %v1008 = vpop.f32.mrf.mxu0
    %v1009 = vadd.f32 0.0, %v1008
    %1010 = vmatmul.f32.gmra.mxu0 %v985
    %v1011 = vpop.f32.mrf.mxu0
    %v1012 = vadd.f32 0.0, %v1011
    %1013 = vdwg.mxu0
    %1014 = vrot.lane.b32.xlu0 %v933, 112
    %v1015 = vpop.permute.xlu0 %1014
    %1016 = vrot.lane.b32.xlu0 %v936, 112
    %v1017 = vpop.permute.xlu0 %1016
    %1018 = vrot.lane.b32.xlu0 %v933, 80
    %v1019 = vpop.permute.xlu0 %1018
    %1020 = vrot.lane.b32.xlu0 %v936, 80
    %v1021 = vpop.permute.xlu0 %1020
    %v1022 = vsel %vm141, %v1015, 0
    %v1024 = vsel %vm141, %v1017, 0
    %v1026 = vsel %vm141, %v1019, 0
    %v1028 = vsel %vm141, %v1021, 0
    %1030 = vmatpush.xpose.msra.mxu0 0.0
    %1031 = vmatpush.xpose.msra.mxu0 0.0
    %1032 = vmatpush.xpose.msra.mxu0 0.0
    %1033 = vmatpush.xpose.msra.mxu0 0.0
    %1034 = vmatpush.xpose.msra.mxu0 0.0
    %1035 = vmatpush.xpose.msra.mxu0 0.0
    %1036 = vmatpush.xpose.msra.mxu0 0.0
    %1037 = vmatpush.xpose.msra.mxu0 0.0
    %1038 = vmatpush.xpose.msra.mxu0 0.0
    %1039 = vmatpush.xpose.msra.mxu0 0.0
    %1040 = vmatpush.xpose.msra.mxu0 0.0
    %1041 = vmatpush.xpose.msra.mxu0 0.0
    %1042 = vmatpush.xpose.msra.mxu0 0.0
    %1043 = vmatpush.xpose.msra.mxu0 0.0
    %1044 = vmatpush.xpose.msra.mxu0 %v1028
    %1045 = vmatpush.xpose.msra.mxu0 %v1026
    %1046 = vmatmul.f32.gmra.mxu0 %v1022
    %v1047 = vpop.f32.mrf.mxu0
    %v1048 = vadd.f32 0.0, %v1047
    %1049 = vmatmul.f32.gmra.mxu0 %v1024
    %v1050 = vpop.f32.mrf.mxu0
    %v1051 = vadd.f32 0.0, %v1050
    %1052 = vdwg.mxu0
    %1053 = vrot.lane.b32.xlu0 %v933, 104
    %v1054 = vpop.permute.xlu0 %1053
    %1055 = vrot.lane.b32.xlu0 %v936, 104
    %v1056 = vpop.permute.xlu0 %1055
    %1057 = vrot.lane.b32.xlu0 %v933, 72
    %v1058 = vpop.permute.xlu0 %1057
    %1059 = vrot.lane.b32.xlu0 %v936, 72
    %v1060 = vpop.permute.xlu0 %1059
    %v1061 = vsel %vm141, %v1054, 0
    %v1063 = vsel %vm141, %v1056, 0
    %v1065 = vsel %vm141, %v1058, 0
    %v1067 = vsel %vm141, %v1060, 0
    %1069 = vmatpush.xpose.msra.mxu0 0.0
    %1070 = vmatpush.xpose.msra.mxu0 0.0
    %1071 = vmatpush.xpose.msra.mxu0 0.0
    %1072 = vmatpush.xpose.msra.mxu0 0.0
    %1073 = vmatpush.xpose.msra.mxu0 0.0
    %1074 = vmatpush.xpose.msra.mxu0 0.0
    %1075 = vmatpush.xpose.msra.mxu0 0.0
    %1076 = vmatpush.xpose.msra.mxu0 0.0
    %1077 = vmatpush.xpose.msra.mxu0 0.0
    %1078 = vmatpush.xpose.msra.mxu0 0.0
    %1079 = vmatpush.xpose.msra.mxu0 0.0
    %1080 = vmatpush.xpose.msra.mxu0 0.0
    %1081 = vmatpush.xpose.msra.mxu0 0.0
    %1082 = vmatpush.xpose.msra.mxu0 0.0
    %1083 = vmatpush.xpose.msra.mxu0 %v1067
    %1084 = vmatpush.xpose.msra.mxu0 %v1065
    %1085 = vmatmul.f32.gmra.mxu0 %v1061
    %v1086 = vpop.f32.mrf.mxu0
    %v1087 = vadd.f32 0.0, %v1086
    %1088 = vmatmul.f32.gmra.mxu0 %v1063
    %v1089 = vpop.f32.mrf.mxu0
    %v1090 = vadd.f32 0.0, %v1089
    %1091 = vdwg.mxu0
    %v1092 = vmul.f32 %v970, 0.35355338
    %v1093 = vmul.f32 %v973, 0.35355338
    %v1094 = vmul.f32 %v1009, 0.35355338
    %v1095 = vmul.f32 %v1012, 0.35355338
    %v1096 = vmul.f32 %v1048, 0.35355338
    %v1097 = vmul.f32 %v1051, 0.35355338
    %v1098 = vmul.f32 %v1087, 0.35355338
    %v1099 = vmul.f32 %v1090, 0.35355338
    %v1100 = vadd.f32 %v1092, %v97
    %v1101 = vadd.f32 %v1093, %v98
    %v1102 = vadd.f32 %v1094, %v97
    %v1103 = vadd.f32 %v1095, %v98
    %v1104 = vadd.f32 %v1096, %v97
    %v1105 = vadd.f32 %v1097, %v98
    %v1106 = vadd.f32 %v1098, %v97
    %v1107 = vadd.f32 %v1099, %v98
    %v1108 = vsel %vm306, %v1100, -inf
    %1109 = vmax.xlane.f32.xlu0 %v1108
    %v1110 = vpop.xlane.xlu0 %1109
    %v1111 = vsel %vm306, %v1101, -inf
    %1112 = vmax.xlane.f32.xlu0 %v1111
    %v1113 = vpop.xlane.xlu0 %1112
    %v1114 = vsel %vm306, %v1102, -inf
    %1115 = vmax.xlane.f32.xlu0 %v1114
    %v1116 = vpop.xlane.xlu0 %1115
    %v1117 = vsel %vm306, %v1103, -inf
    %1118 = vmax.xlane.f32.xlu0 %v1117
    %v1119 = vpop.xlane.xlu0 %1118
    %v1120 = vsel %vm306, %v1104, -inf
    %1121 = vmax.xlane.f32.xlu0 %v1120
    %v1122 = vpop.xlane.xlu0 %1121
    %v1123 = vsel %vm306, %v1105, -inf
    %1124 = vmax.xlane.f32.xlu0 %v1123
    %v1125 = vpop.xlane.xlu0 %1124
    %v1126 = vsel %vm306, %v1106, -inf
    %1127 = vmax.xlane.f32.xlu0 %v1126
    %v1128 = vpop.xlane.xlu0 %1127
    %v1129 = vsel %vm306, %v1107, -inf
    %1130 = vmax.xlane.f32.xlu0 %v1129
    %v1131 = vpop.xlane.xlu0 %1130
    %v1132 = vsub.f32 %v1100, %v1110
    %v1133 = vsub.f32 %v1101, %v1113
    %v1134 = vsub.f32 %v1102, %v1116
    %v1135 = vsub.f32 %v1103, %v1119
    %v1136 = vsub.f32 %v1104, %v1122
    %v1137 = vsub.f32 %v1105, %v1125
    %v1138 = vsub.f32 %v1106, %v1128
    %v1139 = vsub.f32 %v1107, %v1131
    %v1140 = vmul.f32 %v1132, 1.442695
    %v1141 = vpow.pop %v1140
    %v1142 = vmul.f32 %v1133, 1.442695
    %v1143 = vpow.pop %v1142
    %v1144 = vmul.f32 %v1134, 1.442695
    %v1145 = vpow.pop %v1144
    %v1146 = vmul.f32 %v1135, 1.442695
    %v1147 = vpow.pop %v1146
    %v1148 = vmul.f32 %v1136, 1.442695
    %v1149 = vpow.pop %v1148
    %v1150 = vmul.f32 %v1137, 1.442695
    %v1151 = vpow.pop %v1150
    %v1152 = vmul.f32 %v1138, 1.442695
    %v1153 = vpow.pop %v1152
    %v1154 = vmul.f32 %v1139, 1.442695
    %v1155 = vpow.pop %v1154
    %v1156 = vsel %vm306, %v1141, 0.0
    %1157 = vadd.xlane.f32.xlu0 %v1156
    %v1158 = vpop.xlane.xlu0 %1157
    %v1159 = vsel %vm306, %v1143, 0.0
    %1160 = vadd.xlane.f32.xlu0 %v1159
    %v1161 = vpop.xlane.xlu0 %1160
    %v1162 = vsel %vm306, %v1145, 0.0
    %1163 = vadd.xlane.f32.xlu0 %v1162
    %v1164 = vpop.xlane.xlu0 %1163
    %v1165 = vsel %vm306, %v1147, 0.0
    %1166 = vadd.xlane.f32.xlu0 %v1165
    %v1167 = vpop.xlane.xlu0 %1166
    %v1168 = vsel %vm306, %v1149, 0.0
    %1169 = vadd.xlane.f32.xlu0 %v1168
    %v1170 = vpop.xlane.xlu0 %1169
    %v1171 = vsel %vm306, %v1151, 0.0
    %1172 = vadd.xlane.f32.xlu0 %v1171
    %v1173 = vpop.xlane.xlu0 %1172
    %v1174 = vsel %vm306, %v1153, 0.0
    %1175 = vadd.xlane.f32.xlu0 %v1174
    %v1176 = vpop.xlane.xlu0 %1175
    %v1177 = vsel %vm306, %v1155, 0.0
    %1178 = vadd.xlane.f32.xlu0 %v1177
    %v1179 = vpop.xlane.xlu0 %1178
    %v1180 = vrcp.pop %v1158
    %v1181 = vmul.f32 %v1158, %v1180
    %v1182 = vsub.f32 1.0, %v1181
    %v1183 = vmul.f32 %v1180, %v1182
    %v1184 = vadd.f32 %v1180, %v1183
    %vm1185 = vweird.f32 %v1158
    %vm1186 = vweird.f32 %v1180
    %vm1187 = vmor %vm1185, %vm1186
    %v1188 = vsel %vm1187, %v1180, %v1184
    %v1189 = vand.u32 2147483647, %v1158
    %vm1190 = vcmp.eq.f32.partialorder %v1189, 8.507059e+37
    %v1191 = vand.u32 %v1158, 2147483648
    %v1192 = vor.u32 1.1754944e-38, %v1191
    %v1193 = vsel %vm1190, %v1192, %v1188
    %v1194 = vrcp.pop %v1161
    %v1195 = vmul.f32 %v1161, %v1194
    %v1196 = vsub.f32 1.0, %v1195
    %v1197 = vmul.f32 %v1194, %v1196
    %v1198 = vadd.f32 %v1194, %v1197
    %vm1199 = vweird.f32 %v1161
    %vm1200 = vweird.f32 %v1194
    %vm1201 = vmor %vm1199, %vm1200
    %v1202 = vsel %vm1201, %v1194, %v1198
    %v1203 = vand.u32 2147483647, %v1161
    %vm1204 = vcmp.eq.f32.partialorder %v1203, 8.507059e+37
    %v1205 = vand.u32 %v1161, 2147483648
    %v1206 = vor.u32 1.1754944e-38, %v1205
    %v1207 = vsel %vm1204, %v1206, %v1202
    %v1208 = vrcp.pop %v1164
    %v1209 = vmul.f32 %v1164, %v1208
    %v1210 = vsub.f32 1.0, %v1209
    %v1211 = vmul.f32 %v1208, %v1210
    %v1212 = vadd.f32 %v1208, %v1211
    %vm1213 = vweird.f32 %v1164
    %vm1214 = vweird.f32 %v1208
    %vm1215 = vmor %vm1213, %vm1214
    %v1216 = vsel %vm1215, %v1208, %v1212
    %v1217 = vand.u32 2147483647, %v1164
    %vm1218 = vcmp.eq.f32.partialorder %v1217, 8.507059e+37
    %v1219 = vand.u32 %v1164, 2147483648
    %v1220 = vor.u32 1.1754944e-38, %v1219
    %v1221 = vsel %vm1218, %v1220, %v1216
    %v1222 = vrcp.pop %v1167
    %v1223 = vmul.f32 %v1167, %v1222
    %v1224 = vsub.f32 1.0, %v1223
    %v1225 = vmul.f32 %v1222, %v1224
    %v1226 = vadd.f32 %v1222, %v1225
    %vm1227 = vweird.f32 %v1167
    %vm1228 = vweird.f32 %v1222
    %vm1229 = vmor %vm1227, %vm1228
    %v1230 = vsel %vm1229, %v1222, %v1226
    %v1231 = vand.u32 2147483647, %v1167
    %vm1232 = vcmp.eq.f32.partialorder %v1231, 8.507059e+37
    %v1233 = vand.u32 %v1167, 2147483648
    %v1234 = vor.u32 1.1754944e-38, %v1233
    %v1235 = vsel %vm1232, %v1234, %v1230
    %v1236 = vrcp.pop %v1170
    %v1237 = vmul.f32 %v1170, %v1236
    %v1238 = vsub.f32 1.0, %v1237
    %v1239 = vmul.f32 %v1236, %v1238
    %v1240 = vadd.f32 %v1236, %v1239
    %vm1241 = vweird.f32 %v1170
    %vm1242 = vweird.f32 %v1236
    %vm1243 = vmor %vm1241, %vm1242
    %v1244 = vsel %vm1243, %v1236, %v1240
    %v1245 = vand.u32 2147483647, %v1170
    %vm1246 = vcmp.eq.f32.partialorder %v1245, 8.507059e+37
    %v1247 = vand.u32 %v1170, 2147483648
    %v1248 = vor.u32 1.1754944e-38, %v1247
    %v1249 = vsel %vm1246, %v1248, %v1244
    %v1250 = vrcp.pop %v1173
    %v1251 = vmul.f32 %v1173, %v1250
    %v1252 = vsub.f32 1.0, %v1251
    %v1253 = vmul.f32 %v1250, %v1252
    %v1254 = vadd.f32 %v1250, %v1253
    %vm1255 = vweird.f32 %v1173
    %vm1256 = vweird.f32 %v1250
    %vm1257 = vmor %vm1255, %vm1256
    %v1258 = vsel %vm1257, %v1250, %v1254
    %v1259 = vand.u32 2147483647, %v1173
    %vm1260 = vcmp.eq.f32.partialorder %v1259, 8.507059e+37
    %v1261 = vand.u32 %v1173, 2147483648
    %v1262 = vor.u32 1.1754944e-38, %v1261
    %v1263 = vsel %vm1260, %v1262, %v1258
    %v1264 = vrcp.pop %v1176
    %v1265 = vmul.f32 %v1176, %v1264
    %v1266 = vsub.f32 1.0, %v1265
    %v1267 = vmul.f32 %v1264, %v1266
    %v1268 = vadd.f32 %v1264, %v1267
    %vm1269 = vweird.f32 %v1176
    %vm1270 = vweird.f32 %v1264
    %vm1271 = vmor %vm1269, %vm1270
    %v1272 = vsel %vm1271, %v1264, %v1268
    %v1273 = vand.u32 2147483647, %v1176
    %vm1274 = vcmp.eq.f32.partialorder %v1273, 8.507059e+37
    %v1275 = vand.u32 %v1176, 2147483648
    %v1276 = vor.u32 1.1754944e-38, %v1275
    %v1277 = vsel %vm1274, %v1276, %v1272
    %v1278 = vrcp.pop %v1179
    %v1279 = vmul.f32 %v1179, %v1278
    %v1280 = vsub.f32 1.0, %v1279
    %v1281 = vmul.f32 %v1278, %v1280
    %v1282 = vadd.f32 %v1278, %v1281
    %vm1283 = vweird.f32 %v1179
    %vm1284 = vweird.f32 %v1278
    %vm1285 = vmor %vm1283, %vm1284
    %v1286 = vsel %vm1285, %v1278, %v1282
    %v1287 = vand.u32 2147483647, %v1179
    %vm1288 = vcmp.eq.f32.partialorder %v1287, 8.507059e+37
    %v1289 = vand.u32 %v1179, 2147483648
    %v1290 = vor.u32 1.1754944e-38, %v1289
    %v1291 = vsel %vm1288, %v1290, %v1286
    %v1292 = vmul.f32 %v1141, %v1193
    %v1293 = vmul.f32 %v1143, %v1207
    %v1294 = vmul.f32 %v1145, %v1221
    %v1295 = vmul.f32 %v1147, %v1235
    %v1296 = vmul.f32 %v1149, %v1249
    %v1297 = vmul.f32 %v1151, %v1263
    %v1298 = vmul.f32 %v1153, %v1277
    %v1299 = vmul.f32 %v1155, %v1291
    %1300 = vrot.lane.b32.xlu0 %v933, 64
    %v1301 = vpop.permute.xlu0 %1300
    %1302 = vrot.lane.b32.xlu0 %v936, 64
    %v1303 = vpop.permute.xlu0 %1302
    %v1307 = vsel %vm306, %v1292, 0
    %v1310 = vsel %vm306, %v1293, 0
    %1312 = vmatpush.msra.mxu0 0.0
    %1313 = vmatpush.msra.mxu0 0.0
    %1314 = vmatpush.msra.mxu0 0.0
    %1315 = vmatpush.msra.mxu0 0.0
    %1316 = vmatpush.msra.mxu0 0.0
    %1317 = vmatpush.msra.mxu0 0.0
    %1318 = vmatpush.msra.mxu0 0.0
    %1319 = vmatpush.msra.mxu0 0.0
    %1320 = vmatpush.msra.mxu0 0.0
    %1321 = vmatpush.msra.mxu0 0.0
    %1322 = vmatpush.msra.mxu0 0.0
    %1323 = vmatpush.msra.mxu0 0.0
    %1324 = vmatpush.msra.mxu0 0.0
    %1325 = vmatpush.msra.mxu0 0.0
    %1326 = vmatpush.msra.mxu0 %v1303
    %1327 = vmatpush.msra.mxu0 %v1301
    %1328 = vmatmul.f32.gmra.mxu0 %v1307
    %v1329 = vpop.f32.mrf.mxu0
    %v1330 = vadd.f32 0.0, %v1329
    %1331 = vmatmul.f32.gmra.mxu0 %v1310
    %v1332 = vpop.f32.mrf.mxu0
    %v1333 = vadd.f32 0.0, %v1332
    %1334 = vdwg.mxu0
    %1335 = vrot.lane.b32.xlu0 %v933, 56
    %v1336 = vpop.permute.xlu0 %1335
    %1337 = vrot.lane.b32.xlu0 %v936, 56
    %v1338 = vpop.permute.xlu0 %1337
    %v1342 = vsel %vm306, %v1294, 0
    %v1345 = vsel %vm306, %v1295, 0
    %1347 = vmatpush.msra.mxu0 0.0
    %1348 = vmatpush.msra.mxu0 0.0
    %1349 = vmatpush.msra.mxu0 0.0
    %1350 = vmatpush.msra.mxu0 0.0
    %1351 = vmatpush.msra.mxu0 0.0
    %1352 = vmatpush.msra.mxu0 0.0
    %1353 = vmatpush.msra.mxu0 0.0
    %1354 = vmatpush.msra.mxu0 0.0
    %1355 = vmatpush.msra.mxu0 0.0
    %1356 = vmatpush.msra.mxu0 0.0
    %1357 = vmatpush.msra.mxu0 0.0
    %1358 = vmatpush.msra.mxu0 0.0
    %1359 = vmatpush.msra.mxu0 0.0
    %1360 = vmatpush.msra.mxu0 0.0
    %1361 = vmatpush.msra.mxu0 %v1338
    %1362 = vmatpush.msra.mxu0 %v1336
    %1363 = vmatmul.f32.gmra.mxu0 %v1342
    %v1364 = vpop.f32.mrf.mxu0
    %v1365 = vadd.f32 0.0, %v1364
    %1366 = vmatmul.f32.gmra.mxu0 %v1345
    %v1367 = vpop.f32.mrf.mxu0
    %v1368 = vadd.f32 0.0, %v1367
    %1369 = vdwg.mxu0
    %1370 = vrot.lane.b32.xlu0 %v933, 48
    %v1371 = vpop.permute.xlu0 %1370
    %1372 = vrot.lane.b32.xlu0 %v936, 48
    %v1373 = vpop.permute.xlu0 %1372
    %v1377 = vsel %vm306, %v1296, 0
    %v1380 = vsel %vm306, %v1297, 0
    %1382 = vmatpush.msra.mxu0 0.0
    %1383 = vmatpush.msra.mxu0 0.0
    %1384 = vmatpush.msra.mxu0 0.0
    %1385 = vmatpush.msra.mxu0 0.0
    %1386 = vmatpush.msra.mxu0 0.0
    %1387 = vmatpush.msra.mxu0 0.0
    %1388 = vmatpush.msra.mxu0 0.0
    %1389 = vmatpush.msra.mxu0 0.0
    %1390 = vmatpush.msra.mxu0 0.0
    %1391 = vmatpush.msra.mxu0 0.0
    %1392 = vmatpush.msra.mxu0 0.0
    %1393 = vmatpush.msra.mxu0 0.0
    %1394 = vmatpush.msra.mxu0 0.0
    %1395 = vmatpush.msra.mxu0 0.0
    %1396 = vmatpush.msra.mxu0 %v1373
    %1397 = vmatpush.msra.mxu0 %v1371
    %1398 = vmatmul.f32.gmra.mxu0 %v1377
    %v1399 = vpop.f32.mrf.mxu0
    %v1400 = vadd.f32 0.0, %v1399
    %1401 = vmatmul.f32.gmra.mxu0 %v1380
    %v1402 = vpop.f32.mrf.mxu0
    %v1403 = vadd.f32 0.0, %v1402
    %1404 = vdwg.mxu0
    %1405 = vrot.lane.b32.xlu0 %v933, 40
    %v1406 = vpop.permute.xlu0 %1405
    %1407 = vrot.lane.b32.xlu0 %v936, 40
    %v1408 = vpop.permute.xlu0 %1407
    %v1412 = vsel %vm306, %v1298, 0
    %v1415 = vsel %vm306, %v1299, 0
    %1417 = vmatpush.msra.mxu0 0.0
    %1418 = vmatpush.msra.mxu0 0.0
    %1419 = vmatpush.msra.mxu0 0.0
    %1420 = vmatpush.msra.mxu0 0.0
    %1421 = vmatpush.msra.mxu0 0.0
    %1422 = vmatpush.msra.mxu0 0.0
    %1423 = vmatpush.msra.mxu0 0.0
    %1424 = vmatpush.msra.mxu0 0.0
    %1425 = vmatpush.msra.mxu0 0.0
    %1426 = vmatpush.msra.mxu0 0.0
    %1427 = vmatpush.msra.mxu0 0.0
    %1428 = vmatpush.msra.mxu0 0.0
    %1429 = vmatpush.msra.mxu0 0.0
    %1430 = vmatpush.msra.mxu0 0.0
    %1431 = vmatpush.msra.mxu0 %v1408
    %1432 = vmatpush.msra.mxu0 %v1406
    %1433 = vmatmul.f32.gmra.mxu0 %v1412
    %v1434 = vpop.f32.mrf.mxu0
    %v1435 = vadd.f32 0.0, %v1434
    %1436 = vmatmul.f32.gmra.mxu0 %v1415
    %v1437 = vpop.f32.mrf.mxu0
    %v1438 = vadd.f32 0.0, %v1437
    %1439 = vdwg.mxu0
    %1442 = vrot.lane.b32.xlu0 %v1365, 8
    %v1443 = vpop.permute.xlu0 %1442
    %1444 = vrot.lane.b32.xlu0 %v1368, 8
    %v1445 = vpop.permute.xlu0 %1444
    %1450 = vrot.lane.b32.xlu0 %v1400, 16
    %v1451 = vpop.permute.xlu0 %1450
    %1452 = vrot.lane.b32.xlu0 %v1403, 16
    %v1453 = vpop.permute.xlu0 %1452
    %1458 = vrot.lane.b32.xlu0 %v1435, 24
    %v1459 = vpop.permute.xlu0 %1458
    %1460 = vrot.lane.b32.xlu0 %v1438, 24
    %v1461 = vpop.permute.xlu0 %1460
    %v1464 = vsel %vm141, %v1330, %v1443
    %v1465 = vsel %vm141, %v1333, %v1445
    %v1466 = vsel %vm306, %v1464, %v1451
    %v1467 = vsel %vm306, %v1465, %v1453
    %v1468 = vsel %vm667, %v1466, %v1459
    %v1469 = vsel %vm667, %v1467, %v1461
    %s1470 = scalar_lea.vmem %s3, 32
    %v1471 = vld [vmem:[%s1470] sm:$0xff]
    %v1472 = vld [vmem:[%s1470 + $0x8] sm:$0xff]
    %v1473 = vld [vmem:[%s1470 + $0x10] sm:$0xff]
    %v1474 = vld [vmem:[%s1470 + $0x18] sm:$0xff]
    %v1475 = vperm.slane %v900, 0
    %v1477 = vsel %vm39, %v1468, 0
    %v1480 = vsel %vm39, %v1469, 0
    %1482 = vmatpush.msra.mxu0 0.0
    %1483 = vmatpush.msra.mxu0 0.0
    %1484 = vmatpush.msra.mxu0 0.0
    %1485 = vmatpush.msra.mxu0 0.0
    %1486 = vmatpush.msra.mxu0 0.0
    %1487 = vmatpush.msra.mxu0 0.0
    %1488 = vmatpush.msra.mxu0 0.0
    %1489 = vmatpush.msra.mxu0 0.0
    %1490 = vmatpush.msra.mxu0 0.0
    %1491 = vmatpush.msra.mxu0 0.0
    %1492 = vmatpush.msra.mxu0 0.0
    %1493 = vmatpush.msra.mxu0 0.0
    %1494 = vmatpush.msra.mxu0 %v1474
    %1495 = vmatpush.msra.mxu0 %v1473
    %1496 = vmatpush.msra.mxu0 %v1472
    %1497 = vmatpush.msra.mxu0 %v1471
    %1498 = vmatmul.f32.gmra.mxu0 %v1477
    %v1499 = vpop.f32.mrf.mxu0
    %v1500 = vadd.f32 %v1475, %v1499
    %1501 = vmatmul.f32.gmra.mxu0 %v1480
    %v1502 = vpop.f32.mrf.mxu0
    %v1503 = vadd.f32 %v1475, %v1502
    %1504 = vdwg.mxu0
    %v1505 = vadd.f32 %v897, %v1500
    %v1506 = vadd.f32 %v898, %v1503
    %v1507 = vsel %vm39, %v1505, 0.0
    %1508 = vadd.xlane.f32.xlu0 %v1507
    %v1509 = vpop.xlane.xlu0 %1508
    %v1510 = vsel %vm39, %v1506, 0.0
    %1511 = vadd.xlane.f32.xlu0 %v1510
    %v1512 = vpop.xlane.xlu0 %1511
    %v1513 = vmul.f32 %v1509, %v52
    %v1514 = vmul.f32 %v1512, %v52
    %v1515 = vsub.f32 %v1505, %v1513
    %v1516 = vsub.f32 %v1506, %v1514
    %v1517 = vmul.f32 %v1515, %v1515
    %v1518 = vmul.f32 %v1516, %v1516
    %v1519 = vsel %vm39, %v1517, 0.0
    %1520 = vadd.xlane.f32.xlu0 %v1519
    %v1521 = vpop.xlane.xlu0 %1520
    %v1522 = vsel %vm39, %v1518, 0.0
    %1523 = vadd.xlane.f32.xlu0 %v1522
    %v1524 = vpop.xlane.xlu0 %1523
    %v1525 = vmul.f32 %v1521, %v52
    %v1526 = vmul.f32 %v1524, %v52
    %v1527 = vadd.f32 %v1525, 1e-05
    %v1528 = vadd.f32 %v1526, 1e-05
    %v1529 = vrsqrt.pop %v1527
    %v1530 = vmul.f32 %v1529, %v1527
    %v1531 = vmul.f32 %v1530, %v1529
    %v1532 = vmul.f32 0.5, %v1531
    %v1533 = vsub.f32 1.5, %v1532
    %v1534 = vmul.f32 %v1529, %v1533
    %vm1535 = vweird.f32 %v1527
    %vm1536 = vweird.f32 %v1529
    %vm1537 = vmor %vm1535, %vm1536
    %v1538 = vsel %vm1537, %v1529, %v1534
    %v1539 = vrsqrt.pop %v1528
    %v1540 = vmul.f32 %v1539, %v1528
    %v1541 = vmul.f32 %v1540, %v1539
    %v1542 = vmul.f32 0.5, %v1541
    %v1543 = vsub.f32 1.5, %v1542
    %v1544 = vmul.f32 %v1539, %v1543
    %vm1545 = vweird.f32 %v1528
    %vm1546 = vweird.f32 %v1539
    %vm1547 = vmor %vm1545, %vm1546
    %v1548 = vsel %vm1547, %v1539, %v1544
    %v1549 = vmul.f32 %v1515, %v1538
    %v1550 = vmul.f32 %v1516, %v1548
    %v1551 = vperm.slane %v900, 1
    %v1552 = vmul.f32 %v1549, %v1551
    %v1553 = vmul.f32 %v1550, %v1551
    %v1554 = vperm.slane %v900, 2
    %v1555 = vadd.f32 %v1552, %v1554
    %v1556 = vadd.f32 %v1553, %v1554
    %s1557 = scalar_lea.vmem %s4, 32
    %v1558 = vld [vmem:[%s1557] sm:$0xff]
    %v1559 = vld [vmem:[%s1557 + $0x8] sm:$0xff]
    %v1560 = vld [vmem:[%s1557 + $0x10] sm:$0xff]
    %v1561 = vld [vmem:[%s1557 + $0x18] sm:$0xff]
    %v1562 = vperm.slane %v902, 1
    %v1564 = vsel %vm39, %v1555, 0
    %v1567 = vsel %vm39, %v1556, 0
    %1569 = vmatpush.msra.mxu0 0.0
    %1570 = vmatpush.msra.mxu0 0.0
    %1571 = vmatpush.msra.mxu0 0.0
    %1572 = vmatpush.msra.mxu0 0.0
    %1573 = vmatpush.msra.mxu0 0.0
    %1574 = vmatpush.msra.mxu0 0.0
    %1575 = vmatpush.msra.mxu0 0.0
    %1576 = vmatpush.msra.mxu0 0.0
    %1577 = vmatpush.msra.mxu0 0.0
    %1578 = vmatpush.msra.mxu0 0.0
    %1579 = vmatpush.msra.mxu0 0.0
    %1580 = vmatpush.msra.mxu0 0.0
    %1581 = vmatpush.msra.mxu0 %v1561
    %1582 = vmatpush.msra.mxu0 %v1560
    %1583 = vmatpush.msra.mxu0 %v1559
    %1584 = vmatpush.msra.mxu0 %v1558
    %1585 = vmatmul.f32.gmra.mxu0 %v1564
    %v1586 = vpop.f32.mrf.mxu0
    %v1587 = vadd.f32 %v1562, %v1586
    %1588 = vmatmul.f32.gmra.mxu0 %v1567
    %v1589 = vpop.f32.mrf.mxu0
    %v1590 = vadd.f32 %v1562, %v1589
    %1591 = vdwg.mxu0
    %v1592 = vmul.f32 %v1587, 0.5
    %v1593 = vmul.f32 %v1590, 0.5
    %v1594 = vmul.f32 %v1587, %v1587
    %v1595 = vmul.f32 %v1590, %v1590
    %v1596 = vmul.f32 %v1587, %v1594
    %v1597 = vmul.f32 %v1590, %v1595
    %v1598 = vmul.f32 %v1596, 0.044715
    %v1599 = vmul.f32 %v1597, 0.044715
    %v1600 = vadd.f32 %v1587, %v1598
    %v1601 = vadd.f32 %v1590, %v1599
    %v1602 = vmul.f32 %v1600, 0.7978846
    %v1603 = vmul.f32 %v1601, 0.7978846
    %v1604 = vtanh.pop %v1602
    %v1605 = vtanh.pop %v1603
    %v1606 = vadd.f32 %v1604, 1.0
    %v1607 = vadd.f32 %v1605, 1.0
    %v1608 = vmul.f32 %v1592, %v1606
    %v1609 = vmul.f32 %v1593, %v1607
    %s1610 = scalar_lea.vmem %s5, 64
    %v1611 = vld [vmem:[%s1610] sm:$0xff]
    %v1612 = vld [vmem:[%s1610 + $0x8] sm:$0xff]
    %v1613 = vld [vmem:[%s1610 + $0x10] sm:$0xff]
    %v1614 = vld [vmem:[%s1610 + $0x18] sm:$0xff]
    %v1615 = vld [vmem:[%s1610 + $0x20] sm:$0xff]
    %v1616 = vld [vmem:[%s1610 + $0x28] sm:$0xff]
    %v1617 = vld [vmem:[%s1610 + $0x30] sm:$0xff]
    %v1618 = vld [vmem:[%s1610 + $0x38] sm:$0xff]
    %v1619 = vperm.slane %v900, 3
    %v1621 = vsel %vm817, %v1608, 0
    %v1624 = vsel %vm817, %v1609, 0
    %1626 = vmatpush.msra.mxu0 0.0
    %1627 = vmatpush.msra.mxu0 0.0
    %1628 = vmatpush.msra.mxu0 0.0
    %1629 = vmatpush.msra.mxu0 0.0
    %1630 = vmatpush.msra.mxu0 0.0
    %1631 = vmatpush.msra.mxu0 0.0
    %1632 = vmatpush.msra.mxu0 0.0
    %1633 = vmatpush.msra.mxu0 0.0
    %1634 = vmatpush.msra.mxu0 %v1618
    %1635 = vmatpush.msra.mxu0 %v1617
    %1636 = vmatpush.msra.mxu0 %v1616
    %1637 = vmatpush.msra.mxu0 %v1615
    %1638 = vmatpush.msra.mxu0 %v1614
    %1639 = vmatpush.msra.mxu0 %v1613
    %1640 = vmatpush.msra.mxu0 %v1612
    %1641 = vmatpush.msra.mxu0 %v1611
    %1642 = vmatmul.f32.gmra.mxu0 %v1621
    %v1643 = vpop.f32.mrf.mxu0
    %v1644 = vadd.f32 %v1619, %v1643
    %1645 = vmatmul.f32.gmra.mxu0 %v1624
    %v1646 = vpop.f32.mrf.mxu0
    %v1647 = vadd.f32 %v1619, %v1646
    %1648 = vdwg.mxu0
    %v1649 = vadd.f32 %v1555, %v1644
    %v1650 = vadd.f32 %v1556, %v1647
    %v1651 = vsel %vm39, %v1649, 0.0
    %1652 = vadd.xlane.f32.xlu0 %v1651
    %v1653 = vpop.xlane.xlu0 %1652
    %v1654 = vsel %vm39, %v1650, 0.0
    %1655 = vadd.xlane.f32.xlu0 %v1654
    %v1656 = vpop.xlane.xlu0 %1655
    %v1657 = vmul.f32 %v1653, %v52
    %v1658 = vmul.f32 %v1656, %v52
    %v1659 = vsub.f32 %v1649, %v1657
    %v1660 = vsub.f32 %v1650, %v1658
    %v1661 = vmul.f32 %v1659, %v1659
    %v1662 = vmul.f32 %v1660, %v1660
    %v1663 = vsel %vm39, %v1661, 0.0
    %1664 = vadd.xlane.f32.xlu0 %v1663
    %v1665 = vpop.xlane.xlu0 %1664
    %v1666 = vsel %vm39, %v1662, 0.0
    %1667 = vadd.xlane.f32.xlu0 %v1666
    %v1668 = vpop.xlane.xlu0 %1667
    %v1669 = vmul.f32 %v1665, %v52
    %v1670 = vmul.f32 %v1668, %v52
    %v1671 = vadd.f32 %v1669, 1e-05
    %v1672 = vadd.f32 %v1670, 1e-05
    %v1673 = vrsqrt.pop %v1671
    %v1674 = vmul.f32 %v1673, %v1671
    %v1675 = vmul.f32 %v1674, %v1673
    %v1676 = vmul.f32 0.5, %v1675
    %v1677 = vsub.f32 1.5, %v1676
    %v1678 = vmul.f32 %v1673, %v1677
    %vm1679 = vweird.f32 %v1671
    %vm1680 = vweird.f32 %v1673
    %vm1681 = vmor %vm1679, %vm1680
    %v1682 = vsel %vm1681, %v1673, %v1678
    %v1683 = vrsqrt.pop %v1672
    %v1684 = vmul.f32 %v1683, %v1672
    %v1685 = vmul.f32 %v1684, %v1683
    %v1686 = vmul.f32 0.5, %v1685
    %v1687 = vsub.f32 1.5, %v1686
    %v1688 = vmul.f32 %v1683, %v1687
    %vm1689 = vweird.f32 %v1672
    %vm1690 = vweird.f32 %v1683
    %vm1691 = vmor %vm1689, %vm1690
    %v1692 = vsel %vm1691, %v1683, %v1688
    %v1693 = vmul.f32 %v1659, %v1682
    %v1694 = vmul.f32 %v1660, %v1692
    %v1695 = vperm.slane %v900, 4
    %v1696 = vmul.f32 %v1693, %v1695
    %v1697 = vmul.f32 %v1694, %v1695
    %v1698 = vperm.slane %v900, 5
    %v1699 = vadd.f32 %v1696, %v1698
    %v1700 = vadd.f32 %v1697, %v1698
    %v1701 = vlaneseq
    %v1702 = vand.u32 %v1701, 127
    %v1703 = vlaneseq
    %v1704 = vshrl.u32 %v1703, 7
    %v1705 = vmul.u32 %v1704, 8
    %vm1706 = vcmp.eq.s32.totalorder %v1702, %v1705
    %v1707 = vsel %vm1706, 1, 0
    %v1708 = vcvt.s32.f32 %v1707
    %v1710 = vsel %vm306, %v1708, 0
    %1712 = vmatpush.msra.mxu0 0.0
    %1713 = vmatpush.msra.mxu0 0.0
    %1714 = vmatpush.msra.mxu0 0.0
    %1715 = vmatpush.msra.mxu0 0.0
    %1716 = vmatpush.msra.mxu0 0.0
    %1717 = vmatpush.msra.mxu0 0.0
    %1718 = vmatpush.msra.mxu0 0.0
    %1719 = vmatpush.msra.mxu0 0.0
    %1720 = vmatpush.msra.mxu0 0.0
    %1721 = vmatpush.msra.mxu0 0.0
    %1722 = vmatpush.msra.mxu0 0.0
    %1723 = vmatpush.msra.mxu0 0.0
    %1724 = vmatpush.msra.mxu0 0.0
    %1725 = vmatpush.msra.mxu0 0.0
    %1726 = vmatpush.msra.mxu0 %v1700
    %1727 = vmatpush.msra.mxu0 %v1699
    %1728 = vmatmul.f32.gmra.mxu0 %v1710
    %v1729 = vpop.f32.mrf.mxu0
    %v1730 = vadd.f32 0.0, %v1729
    %1731 = vdwg.mxu0
    %v1732 = vld [vmem:[%s9] sm:$0xff]
    %v1733 = vld [vmem:[%s9 + $0x8] sm:$0xff]
    %v1734 = vld [vmem:[%s9 + $0x10] sm:$0xff]
    %v1735 = vld [vmem:[%s9 + $0x18] sm:$0xff]
    %v1736 = vperm.slane %v36, 2
    %v1738 = vsel %vm39, %v1730, 0
    %1740 = vmatpush.msra.mxu0 0.0
    %1741 = vmatpush.msra.mxu0 0.0
    %1742 = vmatpush.msra.mxu0 0.0
    %1743 = vmatpush.msra.mxu0 0.0
    %1744 = vmatpush.msra.mxu0 0.0
    %1745 = vmatpush.msra.mxu0 0.0
    %1746 = vmatpush.msra.mxu0 0.0
    %1747 = vmatpush.msra.mxu0 0.0
    %1748 = vmatpush.msra.mxu0 0.0
    %1749 = vmatpush.msra.mxu0 0.0
    %1750 = vmatpush.msra.mxu0 0.0
    %1751 = vmatpush.msra.mxu0 0.0
    %1752 = vmatpush.msra.mxu0 %v1735
    %1753 = vmatpush.msra.mxu0 %v1734
    %1754 = vmatpush.msra.mxu0 %v1733
    %1755 = vmatpush.msra.mxu0 %v1732
    %1756 = vmatmul.f32.gmra.mxu0 %v1738
    %v1757 = vpop.f32.mrf.mxu0
    %v1758 = vadd.f32 %v1736, %v1757
    %1759 = vdwg.mxu0
    %v1760 = vtanh.pop %v1758
    %v1761 = vperm.slane %v36, 3
    %1766 = vrot.lane.b32.xlu0 %v1732, 96
    %v1767 = vpop.permute.xlu0 %1766
    %1768 = vrot.lane.b32.xlu0 %v1733, 96
    %v1769 = vpop.permute.xlu0 %1768
    %1770 = vrot.lane.b32.xlu0 %v1734, 96
    %v1771 = vpop.permute.xlu0 %1770
    %1772 = vrot.lane.b32.xlu0 %v1735, 96
    %v1773 = vpop.permute.xlu0 %1772
    %v1779 = vsel %vm39, %v1760, 0
    %1781 = vmatpush.msra.mxu0 0.0
    %1782 = vmatpush.msra.mxu0 0.0
    %1783 = vmatpush.msra.mxu0 0.0
    %1784 = vmatpush.msra.mxu0 0.0
    %1785 = vmatpush.msra.mxu0 0.0
    %1786 = vmatpush.msra.mxu0 0.0
    %1787 = vmatpush.msra.mxu0 0.0
    %1788 = vmatpush.msra.mxu0 0.0
    %1789 = vmatpush.msra.mxu0 0.0
    %1790 = vmatpush.msra.mxu0 0.0
    %1791 = vmatpush.msra.mxu0 0.0
    %1792 = vmatpush.msra.mxu0 0.0
    %1793 = vmatpush.msra.mxu0 %v1773
    %1794 = vmatpush.msra.mxu0 %v1771
    %1795 = vmatpush.msra.mxu0 %v1769
    %1796 = vmatpush.msra.mxu0 %v1767
    %1797 = vmatmul.f32.gmra.mxu0 %v1779
    %v1798 = vpop.f32.mrf.mxu0
    %v1799 = vadd.f32 %v1761, %v1798
    %1800 = vdwg.mxu0
    %vm1801 = vcmask 9216
    %1802 = vst.msk [vmem:[#allocation2] sm:$0x3] %vm1801, %v1799
    // Predicated region
    $region42: #{bert_forward.1} parent=1 // pred_check
      _
    $region43: #{bert_forward.1} parent=1 // pred_check_branch
      %1804 = sbr.rel (0) target = $region45
    $region44: #{bert_forward.1} parent=1 // pred_region
      %1806 = vsyncadd [#allocation3], 0
      %s1808 = sshll.u32 [#allocation2], 4
      %s1809 = int_to_ptr.vmem [resolvable:$true] %s1808
      %s1810 = sshll.u32 %s10, 4
      %s1811 = int_to_ptr.hbm [resolvable:$true] %s1810
      %1813 = dma.vmem_to_hbm [thread:$0]  %s1809, 32, %s1811, [#allocation3]
    $region45: #{bert_forward.1} parent=1 // pred_fallthru
      _
    // Predicated region
    $region46: #{bert_forward.1} parent=1 // pred_check
      _
    $region47: #{bert_forward.1} parent=1 // pred_check_branch
      %1815 = sbr.rel (0) target = $region49
    $region48: #{bert_forward.1} parent=1 // pred_region
      %1817 = dma.done [#allocation3], 32
    $region49: #{bert_forward.1} parent=1 // pred_fallthru
      _
    %1818 = vsyncpa [#allocation3], 1

</llo_original>
